<compile_context>
chip_gen: v5e
topology: v5e:2x2
jax: 0.10.0
libtpu: 0.0.40
codegen_flags: <defaults>
</compile_context>

<pallas_src>
import jax
import jax.numpy as jnp
from jax import lax
from jax.experimental import pallas as pl
from jax.experimental.pallas import tpu as pltpu

# ----- model hyper-parameters (mirror RNNTrumpDetector.__init__ args) -----
SEQ_LEN = 8          # sequence_len
N_FEATURES = 4       # n_features
EMBED_DIM = 16       # word_vectors.shape[1]
LSTM_OUT_DIM = 32    # lstm_out_dim
LSTM_LAYERS = 2      # lstm_layers
DENSE_DIMS = (16, 8) # dense_layer_dims
VOCAB = 50           # word_vectors.shape[0]
BATCH = 8

H = LSTM_OUT_DIM
D1, D2 = DENSE_DIMS

# ----- packed-slab layout (all segments 8-row aligned) -----
V_PAD = ((VOCAB + 7) // 8) * 8          # 56
F_PAD = 8                               # features padded to 8 cols
# LSTM slab: (168, 128)
R_W0 = 0                                # folded table @ wih0   (V_PAD, 4H)
R_WHH0 = R_W0 + V_PAD                   # whh0                  (H, 4H)
R_W1 = R_WHH0 + H                       # [wih1; whh1]          (2H, 4H)
R_B0 = R_W1 + 2 * H                     # b0 (b_ih+b_hh)        (1, 4H) in 8 rows
R_B1 = R_B0 + 8                         # b1                    (1, 4H) in 8 rows
LSTM_ROWS = R_B1 + 8                    # 168
# dense-head slab: (96, 16)
R_WD1H = 0                              # (H, D1)
R_WD1F = 32                             # (F, D1) padded to 8 rows
R_BD1 = 40                              # (1, D1) in 8 rows
R_WD2 = 48                              # (D1, D2) lane-padded to (D1, D1)
R_BD2 = 64                              # (1, D2) lane-padded, 8 rows
R_WL = 72                               # (D2, 1) padded to (D1, D1)
R_BL = 88                               # (1, 1) padded, 8 rows
DENSE_ROWS = 96


def rnn_kernel(tok_ref, feat_ref, state_ref, lstm_ref, dense_ref, out_ref):
    B = feat_ref.shape[0]
    TB = tok_ref.shape[0]
    T = TB // B

    # ---- initial hidden state, lane-dense slab [h0 | h1 | c0 | c1] ----------
    h0 = state_ref[:, 0 * H:1 * H]
    h1 = state_ref[:, 1 * H:2 * H]
    c0 = state_ref[:, 2 * H:3 * H]
    c1 = state_ref[:, 3 * H:4 * H]

    whh0 = lstm_ref[R_WHH0:R_WHH0 + H, :]          # (H, 4H)
    w1 = lstm_ref[R_W1:R_W1 + 2 * H, :]            # (2H, 4H) = [wih1; whh1]
    b0 = lstm_ref[R_B0:R_B0 + 1, :]                # (1, 4H)
    b1 = lstm_ref[R_B1:R_B1 + 1, :]                # (1, 4H)

    # ---- embedding folded into layer-0 input projection ---------------------
    # onehot @ (table @ wih0): exact row-select, one MXU matmul, hoisted over T.
    tok = tok_ref[...]                                          # (T*B, 1) i32
    vocab_iota = lax.broadcasted_iota(jnp.int32, (TB, V_PAD), 1)
    onehot = (vocab_iota == tok).astype(jnp.float32)            # (T*B, V_PAD)
    z0_in = jnp.dot(onehot, lstm_ref[R_W0:R_W0 + V_PAD, :],
                    preferred_element_type=jnp.float32) + b0    # (T*B, 4H)

    def lstm_step(z, c_prev):
        # g-gate columns of weights/biases are pre-scaled by 2, so one
        # full-vreg tanh(0.5*z) yields i/f/o via sigmoid(x)=0.5*(1+tanh(x/2))
        # (exact) and g directly.  PyTorch gate order [i, f, g, o].
        a = jnp.tanh(0.5 * z)
        i = 0.5 * (a[:, 0 * H:1 * H] + 1.0)
        f = 0.5 * (a[:, 1 * H:2 * H] + 1.0)
        g = a[:, 2 * H:3 * H]
        o = 0.5 * (a[:, 3 * H:4 * H] + 1.0)
        c_new = f * c_prev + i * g
        h_new = o * jnp.tanh(c_new)
        return h_new, c_new

    # ---- interleaved 2-layer recurrence, fully unrolled ----------------------
    for t in range(T):
        z0 = z0_in[t * B:(t + 1) * B, :] + jnp.dot(
            h0, whh0, preferred_element_type=jnp.float32)
        h0, c0 = lstm_step(z0, c0)
        # inter-layer lstm_dropout: identity (deterministic / eval-mode)
        z1 = jnp.dot(jnp.concatenate([h0, h1], axis=1), w1,
                     preferred_element_type=jnp.float32) + b1
        h1, c1 = lstm_step(z1, c1)

    # ---- dense head (lstm_out[:, -1, :] == h1; lstm_out_dropout: identity) ---
    d = (jnp.dot(h1, dense_ref[R_WD1H:R_WD1H + H, :],
                 preferred_element_type=jnp.float32)
         + jnp.dot(feat_ref[...], dense_ref[R_WD1F:R_WD1F + F_PAD, :],
                   preferred_element_type=jnp.float32)
         + dense_ref[R_BD1:R_BD1 + 1, :])
    d = jnp.maximum(d, 0.0)                                       # (B, D1)
    d = jnp.maximum(
        jnp.dot(d, dense_ref[R_WD2:R_WD2 + D1, :],
                preferred_element_type=jnp.float32)
        + dense_ref[R_BD2:R_BD2 + 1, :], 0.0)                     # (B, D1) lanes>=D2 are 0
    logit = (jnp.dot(d, dense_ref[R_WL:R_WL + D1, :],
                     preferred_element_type=jnp.float32)
             + dense_ref[R_BL:R_BL + 1, :])                       # (B, D1), lane 0 valid
    sig = jax.nn.sigmoid(logit)

    # ---- single packed lane-dense output: [h0 | h1 | c0 | c1 | sigmoid] ------
    out_ref[...] = jnp.concatenate([h0, h1, c0, c1, sig], axis=1)  # (B, 4H+D1)


def init_params(key):
    ks = jax.random.split(key, 17)
    s = 0.1
    E, F = EMBED_DIM, N_FEATURES
    p = {}
    p['embedding'] = jax.random.normal(ks[0], (VOCAB, E), jnp.float32)
    # LSTM weights stored transposed to (in_dim, 4H), gate order [i, f, g, o];
    # biases are b_ih + b_hh combined.
    p['wih0'] = s * jax.random.normal(ks[1], (E, 4 * H), jnp.float32)
    p['whh0'] = s * jax.random.normal(ks[2], (H, 4 * H), jnp.float32)
    p['b0'] = (s * jax.random.normal(ks[3], (1, 4 * H), jnp.float32)
               + s * jax.random.normal(ks[4], (1, 4 * H), jnp.float32))
    p['wih1'] = s * jax.random.normal(ks[5], (H, 4 * H), jnp.float32)
    p['whh1'] = s * jax.random.normal(ks[6], (H, 4 * H), jnp.float32)
    p['b1'] = (s * jax.random.normal(ks[7], (1, 4 * H), jnp.float32)
               + s * jax.random.normal(ks[8], (1, 4 * H), jnp.float32))
    # Dense stack: (H+F)->D1->D2->1, transposed; first Linear pre-split into
    # the H-part (consumes lstm_out) and F-part (consumes features).
    p['wd1_h'] = s * jax.random.normal(ks[9], (H, D1), jnp.float32)
    p['wd1_f'] = s * jax.random.normal(ks[10], (F, D1), jnp.float32)
    p['bd1'] = s * jax.random.normal(ks[11], (1, D1), jnp.float32)
    p['wd2'] = s * jax.random.normal(ks[12], (D1, D2), jnp.float32)
    p['bd2'] = s * jax.random.normal(ks[13], (1, D2), jnp.float32)
    p['wl'] = s * jax.random.normal(ks[14], (D2, 1), jnp.float32)
    p['bl'] = s * jax.random.normal(ks[15], (1, 1), jnp.float32)
    return p


def _scale_g(w):
    """Pre-scale the g-gate column block by 2 (tanh/sigmoid identity trick)."""
    return w.at[:, 2 * H:3 * H].multiply(2.0)


def pack_params(p):
    """Build the two lane-dense weight slabs consumed by the kernel."""
    # ---- LSTM slab (LSTM_ROWS, 4H) = (168, 128) ----
    w0 = jnp.dot(p['embedding'], p['wih0'])               # fold table into wih0
    w0 = jnp.pad(_scale_g(w0), ((0, V_PAD - VOCAB), (0, 0)))
    whh0 = _scale_g(p['whh0'])
    w1 = _scale_g(jnp.concatenate([p['wih1'], p['whh1']], axis=0))
    b0 = jnp.pad(_scale_g(p['b0']), ((0, 7), (0, 0)))
    b1 = jnp.pad(_scale_g(p['b1']), ((0, 7), (0, 0)))
    lstm_slab = jnp.concatenate([w0, whh0, w1, b0, b1], axis=0)
    assert lstm_slab.shape == (LSTM_ROWS, 4 * H)

    # ---- dense-head slab (DENSE_ROWS, D1) = (96, 16) ----
    wd1h = p['wd1_h']                                                # (32, 16)
    wd1f = jnp.pad(p['wd1_f'], ((0, F_PAD - N_FEATURES), (0, 0)))    # (8, 16)
    bd1 = jnp.pad(p['bd1'], ((0, 7), (0, 0)))                        # (8, 16)
    wd2 = jnp.pad(p['wd2'], ((0, 0), (0, D1 - D2)))                  # (16, 16)
    bd2 = jnp.pad(p['bd2'], ((0, 7), (0, D1 - D2)))                  # (8, 16)
    wl = jnp.pad(p['wl'], ((0, D1 - D2), (0, D1 - 1)))               # (16, 16)
    bl = jnp.pad(p['bl'], ((0, 7), (0, D1 - 1)))                     # (8, 16)
    dense_slab = jnp.concatenate([wd1h, wd1f, bd1, wd2, bd2, wl, bl], axis=0)
    assert dense_slab.shape == (DENSE_ROWS, D1)
    return lstm_slab, dense_slab


def forward(x, hidden, packed):
    """Mirrors RNNTrumpDetector.forward(x, hidden) -> (out, hidden)."""
    lstm_slab, dense_slab = packed
    h, c = hidden
    B = x.shape[0]
    x_int = x.astype(jnp.int32)                        # x = x.long()
    tok = x_int[:, :SEQ_LEN]                           # (B, T) token ids
    feats = x_int[:, SEQ_LEN:].astype(jnp.float32)     # (B, F), .long()-truncated
    feats = jnp.pad(feats, ((0, 0), (0, F_PAD - N_FEATURES)))   # (B, 8)
    tok_tm = tok.T.reshape(SEQ_LEN * B, 1)             # time-major flattened ids
    state_in = jnp.concatenate([h[0], h[1], c[0], c[1]], axis=1)   # (B, 4H)

    vmem = pl.BlockSpec(memory_space=pltpu.MemorySpace.VMEM)
    packed_out = pl.pallas_call(
        rnn_kernel,
        out_shape=jax.ShapeDtypeStruct((B, 4 * H + D1), jnp.float32),
        in_specs=[vmem] * 5,
        out_specs=vmem,
    )(tok_tm, feats, state_in, lstm_slab, dense_slab)

    hN = jnp.stack([packed_out[:, 0 * H:1 * H], packed_out[:, 1 * H:2 * H]], axis=0)
    cN = jnp.stack([packed_out[:, 2 * H:3 * H], packed_out[:, 3 * H:4 * H]], axis=0)
    # out.view(B, -1)[:, -1]  (last dense has width 1 -> squeezes to (B,))
    out = packed_out[:, 4 * H]
    return out, (hN, cN)


def init_hidden(batch_size):
    z = jnp.zeros((LSTM_LAYERS, batch_size, H), jnp.float32)
    return (z, z)


if __name__ == "__main__":
    key = jax.random.PRNGKey(0)
    pkey, tkey, fkey = jax.random.split(key, 3)
    params = init_params(pkey)
    packed = pack_params(params)

    # Input x: (B, sequence_len + n_features); first SEQ_LEN cols are token
    # ids, remaining N_FEATURES cols are numeric features (truncated by .long()).
    tokens = jax.random.randint(tkey, (BATCH, SEQ_LEN), 0, VOCAB).astype(jnp.float32)
    features = jax.random.uniform(fkey, (BATCH, N_FEATURES), jnp.float32, 0.0, 10.0)
    x = jnp.concatenate([tokens, features], axis=1)   # (BATCH, SEQ_LEN + N_FEATURES)

    hidden = init_hidden(BATCH)
    out, (hN, cN) = forward(x, hidden, packed)
    jax.block_until_ready((out, hN, cN))

    assert out.shape == (BATCH,)
    assert hN.shape == (LSTM_LAYERS, BATCH, H)
    assert cN.shape == (LSTM_LAYERS, BATCH, H)
    assert bool(jnp.all((out >= 0.0) & (out <= 1.0)))
    assert bool(jnp.all(jnp.isfinite(hN))) and bool(jnp.all(jnp.isfinite(cN)))
    print("KERNEL_OK")
</pallas_src>

<mosaic_0001>
module attributes {stable_mosaic.version = 11 : i64} {
  func.func @rnn_kernel(%arg0: memref<64x1xi32, #tpu.memory_space<vmem>>, %arg1: memref<8x8xf32, #tpu.memory_space<vmem>>, %arg2: memref<8x128xf32, #tpu.memory_space<vmem>>, %arg3: memref<168x128xf32, #tpu.memory_space<vmem>>, %arg4: memref<96x16xf32, #tpu.memory_space<vmem>>, %arg5: memref<8x144xf32, #tpu.memory_space<vmem>>) attributes {dimension_semantics = [], scalar_prefetch = 0 : i64, scratch_operands = 0 : i64, tpu.core_type = #tpu.core_type<tc>} {
    %c0 = arith.constant 0 : index
    %c0_0 = arith.constant 0 : index
    %0 = vector.load %arg2[%c0, %c0_0] : memref<8x128xf32, #tpu.memory_space<vmem>>, vector<8x32xf32>
    %c0_1 = arith.constant 0 : index
    %c32 = arith.constant 32 : index
    %1 = vector.load %arg2[%c0_1, %c32] : memref<8x128xf32, #tpu.memory_space<vmem>>, vector<8x32xf32>
    %c0_2 = arith.constant 0 : index
    %c64 = arith.constant 64 : index
    %2 = vector.load %arg2[%c0_2, %c64] : memref<8x128xf32, #tpu.memory_space<vmem>>, vector<8x32xf32>
    %c0_3 = arith.constant 0 : index
    %c96 = arith.constant 96 : index
    %3 = vector.load %arg2[%c0_3, %c96] : memref<8x128xf32, #tpu.memory_space<vmem>>, vector<8x32xf32>
    %c56 = arith.constant 56 : index
    %c0_4 = arith.constant 0 : index
    %4 = vector.load %arg3[%c56, %c0_4] : memref<168x128xf32, #tpu.memory_space<vmem>>, vector<32x128xf32>
    %c88 = arith.constant 88 : index
    %c0_5 = arith.constant 0 : index
    %5 = vector.load %arg3[%c88, %c0_5] : memref<168x128xf32, #tpu.memory_space<vmem>>, vector<64x128xf32>
    %c152 = arith.constant 152 : index
    %c0_6 = arith.constant 0 : index
    %6 = vector.load %arg3[%c152, %c0_6] : memref<168x128xf32, #tpu.memory_space<vmem>>, vector<1x128xf32>
    %c160 = arith.constant 160 : index
    %c0_7 = arith.constant 0 : index
    %7 = vector.load %arg3[%c160, %c0_7] : memref<168x128xf32, #tpu.memory_space<vmem>>, vector<1x128xf32>
    %c0_8 = arith.constant 0 : index
    %c0_9 = arith.constant 0 : index
    %8 = vector.load %arg0[%c0_8, %c0_9] : memref<64x1xi32, #tpu.memory_space<vmem>>, vector<64x1xi32>
    %9 = tpu.iota {dimensions = array<i32: 1>} : vector<64x56xi32>
    %10 = vector.broadcast %8 : vector<64x1xi32> to vector<64x56xi32>
    %11 = arith.cmpi eq, %9, %10 : vector<64x56xi32>
    %12 = arith.extui %11 : vector<64x56xi1> to vector<64x56xi32>
    %13 = arith.sitofp %12 : vector<64x56xi32> to vector<64x56xf32>
    %c0_10 = arith.constant 0 : index
    %c0_11 = arith.constant 0 : index
    %14 = vector.load %arg3[%c0_10, %c0_11] : memref<168x128xf32, #tpu.memory_space<vmem>>, vector<56x128xf32>
    %cst = arith.constant dense<0.000000e+00> : vector<64x128xf32>
    %15 = tpu.matmul %13, %14, %cst {dimension_numbers = #tpu.dot_dimension_numbers<[1], [0], [0], [1], [0, 0, 1, 1], [], []>} : vector<64x56xf32>, vector<56x128xf32>, vector<64x128xf32> -> vector<64x128xf32>
    %16 = vector.broadcast %6 : vector<1x128xf32> to vector<64x128xf32>
    %17 = arith.addf %15, %16 : vector<64x128xf32>
    %18 = vector.extract_strided_slice %17 {offsets = [0, 0], sizes = [8, 128], strides = [1, 1]} : vector<64x128xf32> to vector<8x128xf32>
    %cst_12 = arith.constant dense<0.000000e+00> : vector<8x128xf32>
    %19 = tpu.matmul %0, %4, %cst_12 {dimension_numbers = #tpu.dot_dimension_numbers<[1], [0], [0], [1], [0, 0, 1, 1], [], []>} : vector<8x32xf32>, vector<32x128xf32>, vector<8x128xf32> -> vector<8x128xf32>
    %20 = arith.addf %18, %19 : vector<8x128xf32>
    %cst_13 = arith.constant 5.000000e-01 : f32
    %21 = vector.broadcast %cst_13 : f32 to vector<8x128xf32>
    %22 = arith.mulf %21, %20 : vector<8x128xf32>
    %23 = math.tanh %22 : vector<8x128xf32>
    %24 = vector.extract_strided_slice %23 {offsets = [0, 0], sizes = [8, 32], strides = [1, 1]} : vector<8x128xf32> to vector<8x32xf32>
    %cst_14 = arith.constant 1.000000e+00 : f32
    %25 = vector.broadcast %cst_14 : f32 to vector<8x32xf32>
    %26 = arith.addf %24, %25 : vector<8x32xf32>
    %cst_15 = arith.constant 5.000000e-01 : f32
    %27 = vector.broadcast %cst_15 : f32 to vector<8x32xf32>
    %28 = arith.mulf %27, %26 : vector<8x32xf32>
    %29 = vector.extract_strided_slice %23 {offsets = [0, 32], sizes = [8, 32], strides = [1, 1]} : vector<8x128xf32> to vector<8x32xf32>
    %cst_16 = arith.constant 1.000000e+00 : f32
    %30 = vector.broadcast %cst_16 : f32 to vector<8x32xf32>
    %31 = arith.addf %29, %30 : vector<8x32xf32>
    %cst_17 = arith.constant 5.000000e-01 : f32
    %32 = vector.broadcast %cst_17 : f32 to vector<8x32xf32>
    %33 = arith.mulf %32, %31 : vector<8x32xf32>
    %34 = vector.extract_strided_slice %23 {offsets = [0, 64], sizes = [8, 32], strides = [1, 1]} : vector<8x128xf32> to vector<8x32xf32>
    %35 = vector.extract_strided_slice %23 {offsets = [0, 96], sizes = [8, 32], strides = [1, 1]} : vector<8x128xf32> to vector<8x32xf32>
    %cst_18 = arith.constant 1.000000e+00 : f32
    %36 = vector.broadcast %cst_18 : f32 to vector<8x32xf32>
    %37 = arith.addf %35, %36 : vector<8x32xf32>
    %cst_19 = arith.constant 5.000000e-01 : f32
    %38 = vector.broadcast %cst_19 : f32 to vector<8x32xf32>
    %39 = arith.mulf %38, %37 : vector<8x32xf32>
    %40 = arith.mulf %33, %2 : vector<8x32xf32>
    %41 = arith.mulf %28, %34 : vector<8x32xf32>
    %42 = arith.addf %40, %41 : vector<8x32xf32>
    %43 = math.tanh %42 : vector<8x32xf32>
    %44 = arith.mulf %39, %43 : vector<8x32xf32>
    %45 = tpu.concatenate %44, %1 in 1 : vector<8x32xf32>, vector<8x32xf32> -> vector<8x64xf32>
    %cst_20 = arith.constant dense<0.000000e+00> : vector<8x128xf32>
    %46 = tpu.matmul %45, %5, %cst_20 {dimension_numbers = #tpu.dot_dimension_numbers<[1], [0], [0], [1], [0, 0, 1, 1], [], []>} : vector<8x64xf32>, vector<64x128xf32>, vector<8x128xf32> -> vector<8x128xf32>
    %47 = vector.broadcast %7 : vector<1x128xf32> to vector<8x128xf32>
    %48 = arith.addf %46, %47 : vector<8x128xf32>
    %cst_21 = arith.constant 5.000000e-01 : f32
    %49 = vector.broadcast %cst_21 : f32 to vector<8x128xf32>
    %50 = arith.mulf %49, %48 : vector<8x128xf32>
    %51 = math.tanh %50 : vector<8x128xf32>
    %52 = vector.extract_strided_slice %51 {offsets = [0, 0], sizes = [8, 32], strides = [1, 1]} : vector<8x128xf32> to vector<8x32xf32>
    %cst_22 = arith.constant 1.000000e+00 : f32
    %53 = vector.broadcast %cst_22 : f32 to vector<8x32xf32>
    %54 = arith.addf %52, %53 : vector<8x32xf32>
    %cst_23 = arith.constant 5.000000e-01 : f32
    %55 = vector.broadcast %cst_23 : f32 to vector<8x32xf32>
    %56 = arith.mulf %55, %54 : vector<8x32xf32>
    %57 = vector.extract_strided_slice %51 {offsets = [0, 32], sizes = [8, 32], strides = [1, 1]} : vector<8x128xf32> to vector<8x32xf32>
    %cst_24 = arith.constant 1.000000e+00 : f32
    %58 = vector.broadcast %cst_24 : f32 to vector<8x32xf32>
    %59 = arith.addf %57, %58 : vector<8x32xf32>
    %cst_25 = arith.constant 5.000000e-01 : f32
    %60 = vector.broadcast %cst_25 : f32 to vector<8x32xf32>
    %61 = arith.mulf %60, %59 : vector<8x32xf32>
    %62 = vector.extract_strided_slice %51 {offsets = [0, 64], sizes = [8, 32], strides = [1, 1]} : vector<8x128xf32> to vector<8x32xf32>
    %63 = vector.extract_strided_slice %51 {offsets = [0, 96], sizes = [8, 32], strides = [1, 1]} : vector<8x128xf32> to vector<8x32xf32>
    %cst_26 = arith.constant 1.000000e+00 : f32
    %64 = vector.broadcast %cst_26 : f32 to vector<8x32xf32>
    %65 = arith.addf %63, %64 : vector<8x32xf32>
    %cst_27 = arith.constant 5.000000e-01 : f32
    %66 = vector.broadcast %cst_27 : f32 to vector<8x32xf32>
    %67 = arith.mulf %66, %65 : vector<8x32xf32>
    %68 = arith.mulf %61, %3 : vector<8x32xf32>
    %69 = arith.mulf %56, %62 : vector<8x32xf32>
    %70 = arith.addf %68, %69 : vector<8x32xf32>
    %71 = math.tanh %70 : vector<8x32xf32>
    %72 = arith.mulf %67, %71 : vector<8x32xf32>
    %73 = vector.extract_strided_slice %17 {offsets = [8, 0], sizes = [8, 128], strides = [1, 1]} : vector<64x128xf32> to vector<8x128xf32>
    %cst_28 = arith.constant dense<0.000000e+00> : vector<8x128xf32>
    %74 = tpu.matmul %44, %4, %cst_28 {dimension_numbers = #tpu.dot_dimension_numbers<[1], [0], [0], [1], [0, 0, 1, 1], [], []>} : vector<8x32xf32>, vector<32x128xf32>, vector<8x128xf32> -> vector<8x128xf32>
    %75 = arith.addf %73, %74 : vector<8x128xf32>
    %cst_29 = arith.constant 5.000000e-01 : f32
    %76 = vector.broadcast %cst_29 : f32 to vector<8x128xf32>
    %77 = arith.mulf %76, %75 : vector<8x128xf32>
    %78 = math.tanh %77 : vector<8x128xf32>
    %79 = vector.extract_strided_slice %78 {offsets = [0, 0], sizes = [8, 32], strides = [1, 1]} : vector<8x128xf32> to vector<8x32xf32>
    %cst_30 = arith.constant 1.000000e+00 : f32
    %80 = vector.broadcast %cst_30 : f32 to vector<8x32xf32>
    %81 = arith.addf %79, %80 : vector<8x32xf32>
    %cst_31 = arith.constant 5.000000e-01 : f32
    %82 = vector.broadcast %cst_31 : f32 to vector<8x32xf32>
    %83 = arith.mulf %82, %81 : vector<8x32xf32>
    %84 = vector.extract_strided_slice %78 {offsets = [0, 32], sizes = [8, 32], strides = [1, 1]} : vector<8x128xf32> to vector<8x32xf32>
    %cst_32 = arith.constant 1.000000e+00 : f32
    %85 = vector.broadcast %cst_32 : f32 to vector<8x32xf32>
    %86 = arith.addf %84, %85 : vector<8x32xf32>
    %cst_33 = arith.constant 5.000000e-01 : f32
    %87 = vector.broadcast %cst_33 : f32 to vector<8x32xf32>
    %88 = arith.mulf %87, %86 : vector<8x32xf32>
    %89 = vector.extract_strided_slice %78 {offsets = [0, 64], sizes = [8, 32], strides = [1, 1]} : vector<8x128xf32> to vector<8x32xf32>
    %90 = vector.extract_strided_slice %78 {offsets = [0, 96], sizes = [8, 32], strides = [1, 1]} : vector<8x128xf32> to vector<8x32xf32>
    %cst_34 = arith.constant 1.000000e+00 : f32
    %91 = vector.broadcast %cst_34 : f32 to vector<8x32xf32>
    %92 = arith.addf %90, %91 : vector<8x32xf32>
    %cst_35 = arith.constant 5.000000e-01 : f32
    %93 = vector.broadcast %cst_35 : f32 to vector<8x32xf32>
    %94 = arith.mulf %93, %92 : vector<8x32xf32>
    %95 = arith.mulf %88, %42 : vector<8x32xf32>
    %96 = arith.mulf %83, %89 : vector<8x32xf32>
    %97 = arith.addf %95, %96 : vector<8x32xf32>
    %98 = math.tanh %97 : vector<8x32xf32>
    %99 = arith.mulf %94, %98 : vector<8x32xf32>
    %100 = tpu.concatenate %99, %72 in 1 : vector<8x32xf32>, vector<8x32xf32> -> vector<8x64xf32>
    %cst_36 = arith.constant dense<0.000000e+00> : vector<8x128xf32>
    %101 = tpu.matmul %100, %5, %cst_36 {dimension_numbers = #tpu.dot_dimension_numbers<[1], [0], [0], [1], [0, 0, 1, 1], [], []>} : vector<8x64xf32>, vector<64x128xf32>, vector<8x128xf32> -> vector<8x128xf32>
    %102 = vector.broadcast %7 : vector<1x128xf32> to vector<8x128xf32>
    %103 = arith.addf %101, %102 : vector<8x128xf32>
    %cst_37 = arith.constant 5.000000e-01 : f32
    %104 = vector.broadcast %cst_37 : f32 to vector<8x128xf32>
    %105 = arith.mulf %104, %103 : vector<8x128xf32>
    %106 = math.tanh %105 : vector<8x128xf32>
    %107 = vector.extract_strided_slice %106 {offsets = [0, 0], sizes = [8, 32], strides = [1, 1]} : vector<8x128xf32> to vector<8x32xf32>
    %cst_38 = arith.constant 1.000000e+00 : f32
    %108 = vector.broadcast %cst_38 : f32 to vector<8x32xf32>
    %109 = arith.addf %107, %108 : vector<8x32xf32>
    %cst_39 = arith.constant 5.000000e-01 : f32
    %110 = vector.broadcast %cst_39 : f32 to vector<8x32xf32>
    %111 = arith.mulf %110, %109 : vector<8x32xf32>
    %112 = vector.extract_strided_slice %106 {offsets = [0, 32], sizes = [8, 32], strides = [1, 1]} : vector<8x128xf32> to vector<8x32xf32>
    %cst_40 = arith.constant 1.000000e+00 : f32
    %113 = vector.broadcast %cst_40 : f32 to vector<8x32xf32>
    %114 = arith.addf %112, %113 : vector<8x32xf32>
    %cst_41 = arith.constant 5.000000e-01 : f32
    %115 = vector.broadcast %cst_41 : f32 to vector<8x32xf32>
    %116 = arith.mulf %115, %114 : vector<8x32xf32>
    %117 = vector.extract_strided_slice %106 {offsets = [0, 64], sizes = [8, 32], strides = [1, 1]} : vector<8x128xf32> to vector<8x32xf32>
    %118 = vector.extract_strided_slice %106 {offsets = [0, 96], sizes = [8, 32], strides = [1, 1]} : vector<8x128xf32> to vector<8x32xf32>
    %cst_42 = arith.constant 1.000000e+00 : f32
    %119 = vector.broadcast %cst_42 : f32 to vector<8x32xf32>
    %120 = arith.addf %118, %119 : vector<8x32xf32>
    %cst_43 = arith.constant 5.000000e-01 : f32
    %121 = vector.broadcast %cst_43 : f32 to vector<8x32xf32>
    %122 = arith.mulf %121, %120 : vector<8x32xf32>
    %123 = arith.mulf %116, %70 : vector<8x32xf32>
    %124 = arith.mulf %111, %117 : vector<8x32xf32>
    %125 = arith.addf %123, %124 : vector<8x32xf32>
    %126 = math.tanh %125 : vector<8x32xf32>
    %127 = arith.mulf %122, %126 : vector<8x32xf32>
    %128 = vector.extract_strided_slice %17 {offsets = [16, 0], sizes = [8, 128], strides = [1, 1]} : vector<64x128xf32> to vector<8x128xf32>
    %cst_44 = arith.constant dense<0.000000e+00> : vector<8x128xf32>
    %129 = tpu.matmul %99, %4, %cst_44 {dimension_numbers = #tpu.dot_dimension_numbers<[1], [0], [0], [1], [0, 0, 1, 1], [], []>} : vector<8x32xf32>, vector<32x128xf32>, vector<8x128xf32> -> vector<8x128xf32>
    %130 = arith.addf %128, %129 : vector<8x128xf32>
    %cst_45 = arith.constant 5.000000e-01 : f32
    %131 = vector.broadcast %cst_45 : f32 to vector<8x128xf32>
    %132 = arith.mulf %131, %130 : vector<8x128xf32>
    %133 = math.tanh %132 : vector<8x128xf32>
    %134 = vector.extract_strided_slice %133 {offsets = [0, 0], sizes = [8, 32], strides = [1, 1]} : vector<8x128xf32> to vector<8x32xf32>
    %cst_46 = arith.constant 1.000000e+00 : f32
    %135 = vector.broadcast %cst_46 : f32 to vector<8x32xf32>
    %136 = arith.addf %134, %135 : vector<8x32xf32>
    %cst_47 = arith.constant 5.000000e-01 : f32
    %137 = vector.broadcast %cst_47 : f32 to vector<8x32xf32>
    %138 = arith.mulf %137, %136 : vector<8x32xf32>
    %139 = vector.extract_strided_slice %133 {offsets = [0, 32], sizes = [8, 32], strides = [1, 1]} : vector<8x128xf32> to vector<8x32xf32>
    %cst_48 = arith.constant 1.000000e+00 : f32
    %140 = vector.broadcast %cst_48 : f32 to vector<8x32xf32>
    %141 = arith.addf %139, %140 : vector<8x32xf32>
    %cst_49 = arith.constant 5.000000e-01 : f32
    %142 = vector.broadcast %cst_49 : f32 to vector<8x32xf32>
    %143 = arith.mulf %142, %141 : vector<8x32xf32>
    %144 = vector.extract_strided_slice %133 {offsets = [0, 64], sizes = [8, 32], strides = [1, 1]} : vector<8x128xf32> to vector<8x32xf32>
    %145 = vector.extract_strided_slice %133 {offsets = [0, 96], sizes = [8, 32], strides = [1, 1]} : vector<8x128xf32> to vector<8x32xf32>
    %cst_50 = arith.constant 1.000000e+00 : f32
    %146 = vector.broadcast %cst_50 : f32 to vector<8x32xf32>
    %147 = arith.addf %145, %146 : vector<8x32xf32>
    %cst_51 = arith.constant 5.000000e-01 : f32
    %148 = vector.broadcast %cst_51 : f32 to vector<8x32xf32>
    %149 = arith.mulf %148, %147 : vector<8x32xf32>
    %150 = arith.mulf %143, %97 : vector<8x32xf32>
    %151 = arith.mulf %138, %144 : vector<8x32xf32>
    %152 = arith.addf %150, %151 : vector<8x32xf32>
    %153 = math.tanh %152 : vector<8x32xf32>
    %154 = arith.mulf %149, %153 : vector<8x32xf32>
    %155 = tpu.concatenate %154, %127 in 1 : vector<8x32xf32>, vector<8x32xf32> -> vector<8x64xf32>
    %cst_52 = arith.constant dense<0.000000e+00> : vector<8x128xf32>
    %156 = tpu.matmul %155, %5, %cst_52 {dimension_numbers = #tpu.dot_dimension_numbers<[1], [0], [0], [1], [0, 0, 1, 1], [], []>} : vector<8x64xf32>, vector<64x128xf32>, vector<8x128xf32> -> vector<8x128xf32>
    %157 = vector.broadcast %7 : vector<1x128xf32> to vector<8x128xf32>
    %158 = arith.addf %156, %157 : vector<8x128xf32>
    %cst_53 = arith.constant 5.000000e-01 : f32
    %159 = vector.broadcast %cst_53 : f32 to vector<8x128xf32>
    %160 = arith.mulf %159, %158 : vector<8x128xf32>
    %161 = math.tanh %160 : vector<8x128xf32>
    %162 = vector.extract_strided_slice %161 {offsets = [0, 0], sizes = [8, 32], strides = [1, 1]} : vector<8x128xf32> to vector<8x32xf32>
    %cst_54 = arith.constant 1.000000e+00 : f32
    %163 = vector.broadcast %cst_54 : f32 to vector<8x32xf32>
    %164 = arith.addf %162, %163 : vector<8x32xf32>
    %cst_55 = arith.constant 5.000000e-01 : f32
    %165 = vector.broadcast %cst_55 : f32 to vector<8x32xf32>
    %166 = arith.mulf %165, %164 : vector<8x32xf32>
    %167 = vector.extract_strided_slice %161 {offsets = [0, 32], sizes = [8, 32], strides = [1, 1]} : vector<8x128xf32> to vector<8x32xf32>
    %cst_56 = arith.constant 1.000000e+00 : f32
    %168 = vector.broadcast %cst_56 : f32 to vector<8x32xf32>
    %169 = arith.addf %167, %168 : vector<8x32xf32>
    %cst_57 = arith.constant 5.000000e-01 : f32
    %170 = vector.broadcast %cst_57 : f32 to vector<8x32xf32>
    %171 = arith.mulf %170, %169 : vector<8x32xf32>
    %172 = vector.extract_strided_slice %161 {offsets = [0, 64], sizes = [8, 32], strides = [1, 1]} : vector<8x128xf32> to vector<8x32xf32>
    %173 = vector.extract_strided_slice %161 {offsets = [0, 96], sizes = [8, 32], strides = [1, 1]} : vector<8x128xf32> to vector<8x32xf32>
    %cst_58 = arith.constant 1.000000e+00 : f32
    %174 = vector.broadcast %cst_58 : f32 to vector<8x32xf32>
    %175 = arith.addf %173, %174 : vector<8x32xf32>
    %cst_59 = arith.constant 5.000000e-01 : f32
    %176 = vector.broadcast %cst_59 : f32 to vector<8x32xf32>
    %177 = arith.mulf %176, %175 : vector<8x32xf32>
    %178 = arith.mulf %171, %125 : vector<8x32xf32>
    %179 = arith.mulf %166, %172 : vector<8x32xf32>
    %180 = arith.addf %178, %179 : vector<8x32xf32>
    %181 = math.tanh %180 : vector<8x32xf32>
    %182 = arith.mulf %177, %181 : vector<8x32xf32>
    %183 = vector.extract_strided_slice %17 {offsets = [24, 0], sizes = [8, 128], strides = [1, 1]} : vector<64x128xf32> to vector<8x128xf32>
    %cst_60 = arith.constant dense<0.000000e+00> : vector<8x128xf32>
    %184 = tpu.matmul %154, %4, %cst_60 {dimension_numbers = #tpu.dot_dimension_numbers<[1], [0], [0], [1], [0, 0, 1, 1], [], []>} : vector<8x32xf32>, vector<32x128xf32>, vector<8x128xf32> -> vector<8x128xf32>
    %185 = arith.addf %183, %184 : vector<8x128xf32>
    %cst_61 = arith.constant 5.000000e-01 : f32
    %186 = vector.broadcast %cst_61 : f32 to vector<8x128xf32>
    %187 = arith.mulf %186, %185 : vector<8x128xf32>
    %188 = math.tanh %187 : vector<8x128xf32>
    %189 = vector.extract_strided_slice %188 {offsets = [0, 0], sizes = [8, 32], strides = [1, 1]} : vector<8x128xf32> to vector<8x32xf32>
    %cst_62 = arith.constant 1.000000e+00 : f32
    %190 = vector.broadcast %cst_62 : f32 to vector<8x32xf32>
    %191 = arith.addf %189, %190 : vector<8x32xf32>
    %cst_63 = arith.constant 5.000000e-01 : f32
    %192 = vector.broadcast %cst_63 : f32 to vector<8x32xf32>
    %193 = arith.mulf %192, %191 : vector<8x32xf32>
    %194 = vector.extract_strided_slice %188 {offsets = [0, 32], sizes = [8, 32], strides = [1, 1]} : vector<8x128xf32> to vector<8x32xf32>
    %cst_64 = arith.constant 1.000000e+00 : f32
    %195 = vector.broadcast %cst_64 : f32 to vector<8x32xf32>
    %196 = arith.addf %194, %195 : vector<8x32xf32>
    %cst_65 = arith.constant 5.000000e-01 : f32
    %197 = vector.broadcast %cst_65 : f32 to vector<8x32xf32>
    %198 = arith.mulf %197, %196 : vector<8x32xf32>
    %199 = vector.extract_strided_slice %188 {offsets = [0, 64], sizes = [8, 32], strides = [1, 1]} : vector<8x128xf32> to vector<8x32xf32>
    %200 = vector.extract_strided_slice %188 {offsets = [0, 96], sizes = [8, 32], strides = [1, 1]} : vector<8x128xf32> to vector<8x32xf32>
    %cst_66 = arith.constant 1.000000e+00 : f32
    %201 = vector.broadcast %cst_66 : f32 to vector<8x32xf32>
    %202 = arith.addf %200, %201 : vector<8x32xf32>
    %cst_67 = arith.constant 5.000000e-01 : f32
    %203 = vector.broadcast %cst_67 : f32 to vector<8x32xf32>
    %204 = arith.mulf %203, %202 : vector<8x32xf32>
    %205 = arith.mulf %198, %152 : vector<8x32xf32>
    %206 = arith.mulf %193, %199 : vector<8x32xf32>
    %207 = arith.addf %205, %206 : vector<8x32xf32>
    %208 = math.tanh %207 : vector<8x32xf32>
    %209 = arith.mulf %204, %208 : vector<8x32xf32>
    %210 = tpu.concatenate %209, %182 in 1 : vector<8x32xf32>, vector<8x32xf32> -> vector<8x64xf32>
    %cst_68 = arith.constant dense<0.000000e+00> : vector<8x128xf32>
    %211 = tpu.matmul %210, %5, %cst_68 {dimension_numbers = #tpu.dot_dimension_numbers<[1], [0], [0], [1], [0, 0, 1, 1], [], []>} : vector<8x64xf32>, vector<64x128xf32>, vector<8x128xf32> -> vector<8x128xf32>
    %212 = vector.broadcast %7 : vector<1x128xf32> to vector<8x128xf32>
    %213 = arith.addf %211, %212 : vector<8x128xf32>
    %cst_69 = arith.constant 5.000000e-01 : f32
    %214 = vector.broadcast %cst_69 : f32 to vector<8x128xf32>
    %215 = arith.mulf %214, %213 : vector<8x128xf32>
    %216 = math.tanh %215 : vector<8x128xf32>
    %217 = vector.extract_strided_slice %216 {offsets = [0, 0], sizes = [8, 32], strides = [1, 1]} : vector<8x128xf32> to vector<8x32xf32>
    %cst_70 = arith.constant 1.000000e+00 : f32
    %218 = vector.broadcast %cst_70 : f32 to vector<8x32xf32>
    %219 = arith.addf %217, %218 : vector<8x32xf32>
    %cst_71 = arith.constant 5.000000e-01 : f32
    %220 = vector.broadcast %cst_71 : f32 to vector<8x32xf32>
    %221 = arith.mulf %220, %219 : vector<8x32xf32>
    %222 = vector.extract_strided_slice %216 {offsets = [0, 32], sizes = [8, 32], strides = [1, 1]} : vector<8x128xf32> to vector<8x32xf32>
    %cst_72 = arith.constant 1.000000e+00 : f32
    %223 = vector.broadcast %cst_72 : f32 to vector<8x32xf32>
    %224 = arith.addf %222, %223 : vector<8x32xf32>
    %cst_73 = arith.constant 5.000000e-01 : f32
    %225 = vector.broadcast %cst_73 : f32 to vector<8x32xf32>
    %226 = arith.mulf %225, %224 : vector<8x32xf32>
    %227 = vector.extract_strided_slice %216 {offsets = [0, 64], sizes = [8, 32], strides = [1, 1]} : vector<8x128xf32> to vector<8x32xf32>
    %228 = vector.extract_strided_slice %216 {offsets = [0, 96], sizes = [8, 32], strides = [1, 1]} : vector<8x128xf32> to vector<8x32xf32>
    %cst_74 = arith.constant 1.000000e+00 : f32
    %229 = vector.broadcast %cst_74 : f32 to vector<8x32xf32>
    %230 = arith.addf %228, %229 : vector<8x32xf32>
    %cst_75 = arith.constant 5.000000e-01 : f32
    %231 = vector.broadcast %cst_75 : f32 to vector<8x32xf32>
    %232 = arith.mulf %231, %230 : vector<8x32xf32>
    %233 = arith.mulf %226, %180 : vector<8x32xf32>
    %234 = arith.mulf %221, %227 : vector<8x32xf32>
    %235 = arith.addf %233, %234 : vector<8x32xf32>
    %236 = math.tanh %235 : vector<8x32xf32>
    %237 = arith.mulf %232, %236 : vector<8x32xf32>
    %238 = vector.extract_strided_slice %17 {offsets = [32, 0], sizes = [8, 128], strides = [1, 1]} : vector<64x128xf32> to vector<8x128xf32>
    %cst_76 = arith.constant dense<0.000000e+00> : vector<8x128xf32>
    %239 = tpu.matmul %209, %4, %cst_76 {dimension_numbers = #tpu.dot_dimension_numbers<[1], [0], [0], [1], [0, 0, 1, 1], [], []>} : vector<8x32xf32>, vector<32x128xf32>, vector<8x128xf32> -> vector<8x128xf32>
    %240 = arith.addf %238, %239 : vector<8x128xf32>
    %cst_77 = arith.constant 5.000000e-01 : f32
    %241 = vector.broadcast %cst_77 : f32 to vector<8x128xf32>
    %242 = arith.mulf %241, %240 : vector<8x128xf32>
    %243 = math.tanh %242 : vector<8x128xf32>
    %244 = vector.extract_strided_slice %243 {offsets = [0, 0], sizes = [8, 32], strides = [1, 1]} : vector<8x128xf32> to vector<8x32xf32>
    %cst_78 = arith.constant 1.000000e+00 : f32
    %245 = vector.broadcast %cst_78 : f32 to vector<8x32xf32>
    %246 = arith.addf %244, %245 : vector<8x32xf32>
    %cst_79 = arith.constant 5.000000e-01 : f32
    %247 = vector.broadcast %cst_79 : f32 to vector<8x32xf32>
    %248 = arith.mulf %247, %246 : vector<8x32xf32>
    %249 = vector.extract_strided_slice %243 {offsets = [0, 32], sizes = [8, 32], strides = [1, 1]} : vector<8x128xf32> to vector<8x32xf32>
    %cst_80 = arith.constant 1.000000e+00 : f32
    %250 = vector.broadcast %cst_80 : f32 to vector<8x32xf32>
    %251 = arith.addf %249, %250 : vector<8x32xf32>
    %cst_81 = arith.constant 5.000000e-01 : f32
    %252 = vector.broadcast %cst_81 : f32 to vector<8x32xf32>
    %253 = arith.mulf %252, %251 : vector<8x32xf32>
    %254 = vector.extract_strided_slice %243 {offsets = [0, 64], sizes = [8, 32], strides = [1, 1]} : vector<8x128xf32> to vector<8x32xf32>
    %255 = vector.extract_strided_slice %243 {offsets = [0, 96], sizes = [8, 32], strides = [1, 1]} : vector<8x128xf32> to vector<8x32xf32>
    %cst_82 = arith.constant 1.000000e+00 : f32
    %256 = vector.broadcast %cst_82 : f32 to vector<8x32xf32>
    %257 = arith.addf %255, %256 : vector<8x32xf32>
    %cst_83 = arith.constant 5.000000e-01 : f32
    %258 = vector.broadcast %cst_83 : f32 to vector<8x32xf32>
    %259 = arith.mulf %258, %257 : vector<8x32xf32>
    %260 = arith.mulf %253, %207 : vector<8x32xf32>
    %261 = arith.mulf %248, %254 : vector<8x32xf32>
    %262 = arith.addf %260, %261 : vector<8x32xf32>
    %263 = math.tanh %262 : vector<8x32xf32>
    %264 = arith.mulf %259, %263 : vector<8x32xf32>
    %265 = tpu.concatenate %264, %237 in 1 : vector<8x32xf32>, vector<8x32xf32> -> vector<8x64xf32>
    %cst_84 = arith.constant dense<0.000000e+00> : vector<8x128xf32>
    %266 = tpu.matmul %265, %5, %cst_84 {dimension_numbers = #tpu.dot_dimension_numbers<[1], [0], [0], [1], [0, 0, 1, 1], [], []>} : vector<8x64xf32>, vector<64x128xf32>, vector<8x128xf32> -> vector<8x128xf32>
    %267 = vector.broadcast %7 : vector<1x128xf32> to vector<8x128xf32>
    %268 = arith.addf %266, %267 : vector<8x128xf32>
    %cst_85 = arith.constant 5.000000e-01 : f32
    %269 = vector.broadcast %cst_85 : f32 to vector<8x128xf32>
    %270 = arith.mulf %269, %268 : vector<8x128xf32>
    %271 = math.tanh %270 : vector<8x128xf32>
    %272 = vector.extract_strided_slice %271 {offsets = [0, 0], sizes = [8, 32], strides = [1, 1]} : vector<8x128xf32> to vector<8x32xf32>
    %cst_86 = arith.constant 1.000000e+00 : f32
    %273 = vector.broadcast %cst_86 : f32 to vector<8x32xf32>
    %274 = arith.addf %272, %273 : vector<8x32xf32>
    %cst_87 = arith.constant 5.000000e-01 : f32
    %275 = vector.broadcast %cst_87 : f32 to vector<8x32xf32>
    %276 = arith.mulf %275, %274 : vector<8x32xf32>
    %277 = vector.extract_strided_slice %271 {offsets = [0, 32], sizes = [8, 32], strides = [1, 1]} : vector<8x128xf32> to vector<8x32xf32>
    %cst_88 = arith.constant 1.000000e+00 : f32
    %278 = vector.broadcast %cst_88 : f32 to vector<8x32xf32>
    %279 = arith.addf %277, %278 : vector<8x32xf32>
    %cst_89 = arith.constant 5.000000e-01 : f32
    %280 = vector.broadcast %cst_89 : f32 to vector<8x32xf32>
    %281 = arith.mulf %280, %279 : vector<8x32xf32>
    %282 = vector.extract_strided_slice %271 {offsets = [0, 64], sizes = [8, 32], strides = [1, 1]} : vector<8x128xf32> to vector<8x32xf32>
    %283 = vector.extract_strided_slice %271 {offsets = [0, 96], sizes = [8, 32], strides = [1, 1]} : vector<8x128xf32> to vector<8x32xf32>
    %cst_90 = arith.constant 1.000000e+00 : f32
    %284 = vector.broadcast %cst_90 : f32 to vector<8x32xf32>
    %285 = arith.addf %283, %284 : vector<8x32xf32>
    %cst_91 = arith.constant 5.000000e-01 : f32
    %286 = vector.broadcast %cst_91 : f32 to vector<8x32xf32>
    %287 = arith.mulf %286, %285 : vector<8x32xf32>
    %288 = arith.mulf %281, %235 : vector<8x32xf32>
    %289 = arith.mulf %276, %282 : vector<8x32xf32>
    %290 = arith.addf %288, %289 : vector<8x32xf32>
    %291 = math.tanh %290 : vector<8x32xf32>
    %292 = arith.mulf %287, %291 : vector<8x32xf32>
    %293 = vector.extract_strided_slice %17 {offsets = [40, 0], sizes = [8, 128], strides = [1, 1]} : vector<64x128xf32> to vector<8x128xf32>
    %cst_92 = arith.constant dense<0.000000e+00> : vector<8x128xf32>
    %294 = tpu.matmul %264, %4, %cst_92 {dimension_numbers = #tpu.dot_dimension_numbers<[1], [0], [0], [1], [0, 0, 1, 1], [], []>} : vector<8x32xf32>, vector<32x128xf32>, vector<8x128xf32> -> vector<8x128xf32>
    %295 = arith.addf %293, %294 : vector<8x128xf32>
    %cst_93 = arith.constant 5.000000e-01 : f32
    %296 = vector.broadcast %cst_93 : f32 to vector<8x128xf32>
    %297 = arith.mulf %296, %295 : vector<8x128xf32>
    %298 = math.tanh %297 : vector<8x128xf32>
    %299 = vector.extract_strided_slice %298 {offsets = [0, 0], sizes = [8, 32], strides = [1, 1]} : vector<8x128xf32> to vector<8x32xf32>
    %cst_94 = arith.constant 1.000000e+00 : f32
    %300 = vector.broadcast %cst_94 : f32 to vector<8x32xf32>
    %301 = arith.addf %299, %300 : vector<8x32xf32>
    %cst_95 = arith.constant 5.000000e-01 : f32
    %302 = vector.broadcast %cst_95 : f32 to vector<8x32xf32>
    %303 = arith.mulf %302, %301 : vector<8x32xf32>
    %304 = vector.extract_strided_slice %298 {offsets = [0, 32], sizes = [8, 32], strides = [1, 1]} : vector<8x128xf32> to vector<8x32xf32>
    %cst_96 = arith.constant 1.000000e+00 : f32
    %305 = vector.broadcast %cst_96 : f32 to vector<8x32xf32>
    %306 = arith.addf %304, %305 : vector<8x32xf32>
    %cst_97 = arith.constant 5.000000e-01 : f32
    %307 = vector.broadcast %cst_97 : f32 to vector<8x32xf32>
    %308 = arith.mulf %307, %306 : vector<8x32xf32>
    %309 = vector.extract_strided_slice %298 {offsets = [0, 64], sizes = [8, 32], strides = [1, 1]} : vector<8x128xf32> to vector<8x32xf32>
    %310 = vector.extract_strided_slice %298 {offsets = [0, 96], sizes = [8, 32], strides = [1, 1]} : vector<8x128xf32> to vector<8x32xf32>
    %cst_98 = arith.constant 1.000000e+00 : f32
    %311 = vector.broadcast %cst_98 : f32 to vector<8x32xf32>
    %312 = arith.addf %310, %311 : vector<8x32xf32>
    %cst_99 = arith.constant 5.000000e-01 : f32
    %313 = vector.broadcast %cst_99 : f32 to vector<8x32xf32>
    %314 = arith.mulf %313, %312 : vector<8x32xf32>
    %315 = arith.mulf %308, %262 : vector<8x32xf32>
    %316 = arith.mulf %303, %309 : vector<8x32xf32>
    %317 = arith.addf %315, %316 : vector<8x32xf32>
    %318 = math.tanh %317 : vector<8x32xf32>
    %319 = arith.mulf %314, %318 : vector<8x32xf32>
    %320 = tpu.concatenate %319, %292 in 1 : vector<8x32xf32>, vector<8x32xf32> -> vector<8x64xf32>
    %cst_100 = arith.constant dense<0.000000e+00> : vector<8x128xf32>
    %321 = tpu.matmul %320, %5, %cst_100 {dimension_numbers = #tpu.dot_dimension_numbers<[1], [0], [0], [1], [0, 0, 1, 1], [], []>} : vector<8x64xf32>, vector<64x128xf32>, vector<8x128xf32> -> vector<8x128xf32>
    %322 = vector.broadcast %7 : vector<1x128xf32> to vector<8x128xf32>
    %323 = arith.addf %321, %322 : vector<8x128xf32>
    %cst_101 = arith.constant 5.000000e-01 : f32
    %324 = vector.broadcast %cst_101 : f32 to vector<8x128xf32>
    %325 = arith.mulf %324, %323 : vector<8x128xf32>
    %326 = math.tanh %325 : vector<8x128xf32>
    %327 = vector.extract_strided_slice %326 {offsets = [0, 0], sizes = [8, 32], strides = [1, 1]} : vector<8x128xf32> to vector<8x32xf32>
    %cst_102 = arith.constant 1.000000e+00 : f32
    %328 = vector.broadcast %cst_102 : f32 to vector<8x32xf32>
    %329 = arith.addf %327, %328 : vector<8x32xf32>
    %cst_103 = arith.constant 5.000000e-01 : f32
    %330 = vector.broadcast %cst_103 : f32 to vector<8x32xf32>
    %331 = arith.mulf %330, %329 : vector<8x32xf32>
    %332 = vector.extract_strided_slice %326 {offsets = [0, 32], sizes = [8, 32], strides = [1, 1]} : vector<8x128xf32> to vector<8x32xf32>
    %cst_104 = arith.constant 1.000000e+00 : f32
    %333 = vector.broadcast %cst_104 : f32 to vector<8x32xf32>
    %334 = arith.addf %332, %333 : vector<8x32xf32>
    %cst_105 = arith.constant 5.000000e-01 : f32
    %335 = vector.broadcast %cst_105 : f32 to vector<8x32xf32>
    %336 = arith.mulf %335, %334 : vector<8x32xf32>
    %337 = vector.extract_strided_slice %326 {offsets = [0, 64], sizes = [8, 32], strides = [1, 1]} : vector<8x128xf32> to vector<8x32xf32>
    %338 = vector.extract_strided_slice %326 {offsets = [0, 96], sizes = [8, 32], strides = [1, 1]} : vector<8x128xf32> to vector<8x32xf32>
    %cst_106 = arith.constant 1.000000e+00 : f32
    %339 = vector.broadcast %cst_106 : f32 to vector<8x32xf32>
    %340 = arith.addf %338, %339 : vector<8x32xf32>
    %cst_107 = arith.constant 5.000000e-01 : f32
    %341 = vector.broadcast %cst_107 : f32 to vector<8x32xf32>
    %342 = arith.mulf %341, %340 : vector<8x32xf32>
    %343 = arith.mulf %336, %290 : vector<8x32xf32>
    %344 = arith.mulf %331, %337 : vector<8x32xf32>
    %345 = arith.addf %343, %344 : vector<8x32xf32>
    %346 = math.tanh %345 : vector<8x32xf32>
    %347 = arith.mulf %342, %346 : vector<8x32xf32>
    %348 = vector.extract_strided_slice %17 {offsets = [48, 0], sizes = [8, 128], strides = [1, 1]} : vector<64x128xf32> to vector<8x128xf32>
    %cst_108 = arith.constant dense<0.000000e+00> : vector<8x128xf32>
    %349 = tpu.matmul %319, %4, %cst_108 {dimension_numbers = #tpu.dot_dimension_numbers<[1], [0], [0], [1], [0, 0, 1, 1], [], []>} : vector<8x32xf32>, vector<32x128xf32>, vector<8x128xf32> -> vector<8x128xf32>
    %350 = arith.addf %348, %349 : vector<8x128xf32>
    %cst_109 = arith.constant 5.000000e-01 : f32
    %351 = vector.broadcast %cst_109 : f32 to vector<8x128xf32>
    %352 = arith.mulf %351, %350 : vector<8x128xf32>
    %353 = math.tanh %352 : vector<8x128xf32>
    %354 = vector.extract_strided_slice %353 {offsets = [0, 0], sizes = [8, 32], strides = [1, 1]} : vector<8x128xf32> to vector<8x32xf32>
    %cst_110 = arith.constant 1.000000e+00 : f32
    %355 = vector.broadcast %cst_110 : f32 to vector<8x32xf32>
    %356 = arith.addf %354, %355 : vector<8x32xf32>
    %cst_111 = arith.constant 5.000000e-01 : f32
    %357 = vector.broadcast %cst_111 : f32 to vector<8x32xf32>
    %358 = arith.mulf %357, %356 : vector<8x32xf32>
    %359 = vector.extract_strided_slice %353 {offsets = [0, 32], sizes = [8, 32], strides = [1, 1]} : vector<8x128xf32> to vector<8x32xf32>
    %cst_112 = arith.constant 1.000000e+00 : f32
    %360 = vector.broadcast %cst_112 : f32 to vector<8x32xf32>
    %361 = arith.addf %359, %360 : vector<8x32xf32>
    %cst_113 = arith.constant 5.000000e-01 : f32
    %362 = vector.broadcast %cst_113 : f32 to vector<8x32xf32>
    %363 = arith.mulf %362, %361 : vector<8x32xf32>
    %364 = vector.extract_strided_slice %353 {offsets = [0, 64], sizes = [8, 32], strides = [1, 1]} : vector<8x128xf32> to vector<8x32xf32>
    %365 = vector.extract_strided_slice %353 {offsets = [0, 96], sizes = [8, 32], strides = [1, 1]} : vector<8x128xf32> to vector<8x32xf32>
    %cst_114 = arith.constant 1.000000e+00 : f32
    %366 = vector.broadcast %cst_114 : f32 to vector<8x32xf32>
    %367 = arith.addf %365, %366 : vector<8x32xf32>
    %cst_115 = arith.constant 5.000000e-01 : f32
    %368 = vector.broadcast %cst_115 : f32 to vector<8x32xf32>
    %369 = arith.mulf %368, %367 : vector<8x32xf32>
    %370 = arith.mulf %363, %317 : vector<8x32xf32>
    %371 = arith.mulf %358, %364 : vector<8x32xf32>
    %372 = arith.addf %370, %371 : vector<8x32xf32>
    %373 = math.tanh %372 : vector<8x32xf32>
    %374 = arith.mulf %369, %373 : vector<8x32xf32>
    %375 = tpu.concatenate %374, %347 in 1 : vector<8x32xf32>, vector<8x32xf32> -> vector<8x64xf32>
    %cst_116 = arith.constant dense<0.000000e+00> : vector<8x128xf32>
    %376 = tpu.matmul %375, %5, %cst_116 {dimension_numbers = #tpu.dot_dimension_numbers<[1], [0], [0], [1], [0, 0, 1, 1], [], []>} : vector<8x64xf32>, vector<64x128xf32>, vector<8x128xf32> -> vector<8x128xf32>
    %377 = vector.broadcast %7 : vector<1x128xf32> to vector<8x128xf32>
    %378 = arith.addf %376, %377 : vector<8x128xf32>
    %cst_117 = arith.constant 5.000000e-01 : f32
    %379 = vector.broadcast %cst_117 : f32 to vector<8x128xf32>
    %380 = arith.mulf %379, %378 : vector<8x128xf32>
    %381 = math.tanh %380 : vector<8x128xf32>
    %382 = vector.extract_strided_slice %381 {offsets = [0, 0], sizes = [8, 32], strides = [1, 1]} : vector<8x128xf32> to vector<8x32xf32>
    %cst_118 = arith.constant 1.000000e+00 : f32
    %383 = vector.broadcast %cst_118 : f32 to vector<8x32xf32>
    %384 = arith.addf %382, %383 : vector<8x32xf32>
    %cst_119 = arith.constant 5.000000e-01 : f32
    %385 = vector.broadcast %cst_119 : f32 to vector<8x32xf32>
    %386 = arith.mulf %385, %384 : vector<8x32xf32>
    %387 = vector.extract_strided_slice %381 {offsets = [0, 32], sizes = [8, 32], strides = [1, 1]} : vector<8x128xf32> to vector<8x32xf32>
    %cst_120 = arith.constant 1.000000e+00 : f32
    %388 = vector.broadcast %cst_120 : f32 to vector<8x32xf32>
    %389 = arith.addf %387, %388 : vector<8x32xf32>
    %cst_121 = arith.constant 5.000000e-01 : f32
    %390 = vector.broadcast %cst_121 : f32 to vector<8x32xf32>
    %391 = arith.mulf %390, %389 : vector<8x32xf32>
    %392 = vector.extract_strided_slice %381 {offsets = [0, 64], sizes = [8, 32], strides = [1, 1]} : vector<8x128xf32> to vector<8x32xf32>
    %393 = vector.extract_strided_slice %381 {offsets = [0, 96], sizes = [8, 32], strides = [1, 1]} : vector<8x128xf32> to vector<8x32xf32>
    %cst_122 = arith.constant 1.000000e+00 : f32
    %394 = vector.broadcast %cst_122 : f32 to vector<8x32xf32>
    %395 = arith.addf %393, %394 : vector<8x32xf32>
    %cst_123 = arith.constant 5.000000e-01 : f32
    %396 = vector.broadcast %cst_123 : f32 to vector<8x32xf32>
    %397 = arith.mulf %396, %395 : vector<8x32xf32>
    %398 = arith.mulf %391, %345 : vector<8x32xf32>
    %399 = arith.mulf %386, %392 : vector<8x32xf32>
    %400 = arith.addf %398, %399 : vector<8x32xf32>
    %401 = math.tanh %400 : vector<8x32xf32>
    %402 = arith.mulf %397, %401 : vector<8x32xf32>
    %403 = vector.extract_strided_slice %17 {offsets = [56, 0], sizes = [8, 128], strides = [1, 1]} : vector<64x128xf32> to vector<8x128xf32>
    %cst_124 = arith.constant dense<0.000000e+00> : vector<8x128xf32>
    %404 = tpu.matmul %374, %4, %cst_124 {dimension_numbers = #tpu.dot_dimension_numbers<[1], [0], [0], [1], [0, 0, 1, 1], [], []>} : vector<8x32xf32>, vector<32x128xf32>, vector<8x128xf32> -> vector<8x128xf32>
    %405 = arith.addf %403, %404 : vector<8x128xf32>
    %cst_125 = arith.constant 5.000000e-01 : f32
    %406 = vector.broadcast %cst_125 : f32 to vector<8x128xf32>
    %407 = arith.mulf %406, %405 : vector<8x128xf32>
    %408 = math.tanh %407 : vector<8x128xf32>
    %409 = vector.extract_strided_slice %408 {offsets = [0, 0], sizes = [8, 32], strides = [1, 1]} : vector<8x128xf32> to vector<8x32xf32>
    %cst_126 = arith.constant 1.000000e+00 : f32
    %410 = vector.broadcast %cst_126 : f32 to vector<8x32xf32>
    %411 = arith.addf %409, %410 : vector<8x32xf32>
    %cst_127 = arith.constant 5.000000e-01 : f32
    %412 = vector.broadcast %cst_127 : f32 to vector<8x32xf32>
    %413 = arith.mulf %412, %411 : vector<8x32xf32>
    %414 = vector.extract_strided_slice %408 {offsets = [0, 32], sizes = [8, 32], strides = [1, 1]} : vector<8x128xf32> to vector<8x32xf32>
    %cst_128 = arith.constant 1.000000e+00 : f32
    %415 = vector.broadcast %cst_128 : f32 to vector<8x32xf32>
    %416 = arith.addf %414, %415 : vector<8x32xf32>
    %cst_129 = arith.constant 5.000000e-01 : f32
    %417 = vector.broadcast %cst_129 : f32 to vector<8x32xf32>
    %418 = arith.mulf %417, %416 : vector<8x32xf32>
    %419 = vector.extract_strided_slice %408 {offsets = [0, 64], sizes = [8, 32], strides = [1, 1]} : vector<8x128xf32> to vector<8x32xf32>
    %420 = vector.extract_strided_slice %408 {offsets = [0, 96], sizes = [8, 32], strides = [1, 1]} : vector<8x128xf32> to vector<8x32xf32>
    %cst_130 = arith.constant 1.000000e+00 : f32
    %421 = vector.broadcast %cst_130 : f32 to vector<8x32xf32>
    %422 = arith.addf %420, %421 : vector<8x32xf32>
    %cst_131 = arith.constant 5.000000e-01 : f32
    %423 = vector.broadcast %cst_131 : f32 to vector<8x32xf32>
    %424 = arith.mulf %423, %422 : vector<8x32xf32>
    %425 = arith.mulf %418, %372 : vector<8x32xf32>
    %426 = arith.mulf %413, %419 : vector<8x32xf32>
    %427 = arith.addf %425, %426 : vector<8x32xf32>
    %428 = math.tanh %427 : vector<8x32xf32>
    %429 = arith.mulf %424, %428 : vector<8x32xf32>
    %430 = tpu.concatenate %429, %402 in 1 : vector<8x32xf32>, vector<8x32xf32> -> vector<8x64xf32>
    %cst_132 = arith.constant dense<0.000000e+00> : vector<8x128xf32>
    %431 = tpu.matmul %430, %5, %cst_132 {dimension_numbers = #tpu.dot_dimension_numbers<[1], [0], [0], [1], [0, 0, 1, 1], [], []>} : vector<8x64xf32>, vector<64x128xf32>, vector<8x128xf32> -> vector<8x128xf32>
    %432 = vector.broadcast %7 : vector<1x128xf32> to vector<8x128xf32>
    %433 = arith.addf %431, %432 : vector<8x128xf32>
    %cst_133 = arith.constant 5.000000e-01 : f32
    %434 = vector.broadcast %cst_133 : f32 to vector<8x128xf32>
    %435 = arith.mulf %434, %433 : vector<8x128xf32>
    %436 = math.tanh %435 : vector<8x128xf32>
    %437 = vector.extract_strided_slice %436 {offsets = [0, 0], sizes = [8, 32], strides = [1, 1]} : vector<8x128xf32> to vector<8x32xf32>
    %cst_134 = arith.constant 1.000000e+00 : f32
    %438 = vector.broadcast %cst_134 : f32 to vector<8x32xf32>
    %439 = arith.addf %437, %438 : vector<8x32xf32>
    %cst_135 = arith.constant 5.000000e-01 : f32
    %440 = vector.broadcast %cst_135 : f32 to vector<8x32xf32>
    %441 = arith.mulf %440, %439 : vector<8x32xf32>
    %442 = vector.extract_strided_slice %436 {offsets = [0, 32], sizes = [8, 32], strides = [1, 1]} : vector<8x128xf32> to vector<8x32xf32>
    %cst_136 = arith.constant 1.000000e+00 : f32
    %443 = vector.broadcast %cst_136 : f32 to vector<8x32xf32>
    %444 = arith.addf %442, %443 : vector<8x32xf32>
    %cst_137 = arith.constant 5.000000e-01 : f32
    %445 = vector.broadcast %cst_137 : f32 to vector<8x32xf32>
    %446 = arith.mulf %445, %444 : vector<8x32xf32>
    %447 = vector.extract_strided_slice %436 {offsets = [0, 64], sizes = [8, 32], strides = [1, 1]} : vector<8x128xf32> to vector<8x32xf32>
    %448 = vector.extract_strided_slice %436 {offsets = [0, 96], sizes = [8, 32], strides = [1, 1]} : vector<8x128xf32> to vector<8x32xf32>
    %cst_138 = arith.constant 1.000000e+00 : f32
    %449 = vector.broadcast %cst_138 : f32 to vector<8x32xf32>
    %450 = arith.addf %448, %449 : vector<8x32xf32>
    %cst_139 = arith.constant 5.000000e-01 : f32
    %451 = vector.broadcast %cst_139 : f32 to vector<8x32xf32>
    %452 = arith.mulf %451, %450 : vector<8x32xf32>
    %453 = arith.mulf %446, %400 : vector<8x32xf32>
    %454 = arith.mulf %441, %447 : vector<8x32xf32>
    %455 = arith.addf %453, %454 : vector<8x32xf32>
    %456 = math.tanh %455 : vector<8x32xf32>
    %457 = arith.mulf %452, %456 : vector<8x32xf32>
    %c0_140 = arith.constant 0 : index
    %c0_141 = arith.constant 0 : index
    %458 = vector.load %arg4[%c0_140, %c0_141] : memref<96x16xf32, #tpu.memory_space<vmem>>, vector<32x16xf32>
    %cst_142 = arith.constant dense<0.000000e+00> : vector<8x16xf32>
    %459 = tpu.matmul %457, %458, %cst_142 {dimension_numbers = #tpu.dot_dimension_numbers<[1], [0], [0], [1], [0, 0, 1, 1], [], []>} : vector<8x32xf32>, vector<32x16xf32>, vector<8x16xf32> -> vector<8x16xf32>
    %c0_143 = arith.constant 0 : index
    %c0_144 = arith.constant 0 : index
    %460 = vector.load %arg1[%c0_143, %c0_144] : memref<8x8xf32, #tpu.memory_space<vmem>>, vector<8x8xf32>
    %c32_145 = arith.constant 32 : index
    %c0_146 = arith.constant 0 : index
    %461 = vector.load %arg4[%c32_145, %c0_146] : memref<96x16xf32, #tpu.memory_space<vmem>>, vector<8x16xf32>
    %cst_147 = arith.constant dense<0.000000e+00> : vector<8x16xf32>
    %462 = tpu.matmul %460, %461, %cst_147 {dimension_numbers = #tpu.dot_dimension_numbers<[1], [0], [0], [1], [0, 0, 1, 1], [], []>} : vector<8x8xf32>, vector<8x16xf32>, vector<8x16xf32> -> vector<8x16xf32>
    %463 = arith.addf %459, %462 : vector<8x16xf32>
    %c40 = arith.constant 40 : index
    %c0_148 = arith.constant 0 : index
    %464 = vector.load %arg4[%c40, %c0_148] : memref<96x16xf32, #tpu.memory_space<vmem>>, vector<1x16xf32>
    %465 = vector.broadcast %464 : vector<1x16xf32> to vector<8x16xf32>
    %466 = arith.addf %463, %465 : vector<8x16xf32>
    %cst_149 = arith.constant 0.000000e+00 : f32
    %467 = vector.broadcast %cst_149 : f32 to vector<8x16xf32>
    %468 = arith.maximumf %466, %467 : vector<8x16xf32>
    %c48 = arith.constant 48 : index
    %c0_150 = arith.constant 0 : index
    %469 = vector.load %arg4[%c48, %c0_150] : memref<96x16xf32, #tpu.memory_space<vmem>>, vector<16x16xf32>
    %cst_151 = arith.constant dense<0.000000e+00> : vector<8x16xf32>
    %470 = tpu.matmul %468, %469, %cst_151 {dimension_numbers = #tpu.dot_dimension_numbers<[1], [0], [0], [1], [0, 0, 1, 1], [], []>} : vector<8x16xf32>, vector<16x16xf32>, vector<8x16xf32> -> vector<8x16xf32>
    %c64_152 = arith.constant 64 : index
    %c0_153 = arith.constant 0 : index
    %471 = vector.load %arg4[%c64_152, %c0_153] : memref<96x16xf32, #tpu.memory_space<vmem>>, vector<1x16xf32>
    %472 = vector.broadcast %471 : vector<1x16xf32> to vector<8x16xf32>
    %473 = arith.addf %470, %472 : vector<8x16xf32>
    %cst_154 = arith.constant 0.000000e+00 : f32
    %474 = vector.broadcast %cst_154 : f32 to vector<8x16xf32>
    %475 = arith.maximumf %473, %474 : vector<8x16xf32>
    %c72 = arith.constant 72 : index
    %c0_155 = arith.constant 0 : index
    %476 = vector.load %arg4[%c72, %c0_155] : memref<96x16xf32, #tpu.memory_space<vmem>>, vector<16x16xf32>
    %cst_156 = arith.constant dense<0.000000e+00> : vector<8x16xf32>
    %477 = tpu.matmul %475, %476, %cst_156 {dimension_numbers = #tpu.dot_dimension_numbers<[1], [0], [0], [1], [0, 0, 1, 1], [], []>} : vector<8x16xf32>, vector<16x16xf32>, vector<8x16xf32> -> vector<8x16xf32>
    %c88_157 = arith.constant 88 : index
    %c0_158 = arith.constant 0 : index
    %478 = vector.load %arg4[%c88_157, %c0_158] : memref<96x16xf32, #tpu.memory_space<vmem>>, vector<1x16xf32>
    %479 = vector.broadcast %478 : vector<1x16xf32> to vector<8x16xf32>
    %480 = arith.addf %477, %479 : vector<8x16xf32>
    %481 = arith.negf %480 : vector<8x16xf32>
    %482 = math.exp %481 : vector<8x16xf32>
    %cst_159 = arith.constant 1.000000e+00 : f32
    %483 = vector.broadcast %cst_159 : f32 to vector<8x16xf32>
    %484 = arith.addf %483, %482 : vector<8x16xf32>
    %485 = arith.divf %483, %484 : vector<8x16xf32>
    %486 = tpu.concatenate %429, %457, %427, %455, %485 in 1 : vector<8x32xf32>, vector<8x32xf32>, vector<8x32xf32>, vector<8x32xf32>, vector<8x16xf32> -> vector<8x144xf32>
    %c0_160 = arith.constant 0 : index
    %c0_161 = arith.constant 0 : index
    %487 = vector.load %arg5[%c0_160, %c0_161] : memref<8x144xf32, #tpu.memory_space<vmem>>, vector<8x144xf32>
    tpu.vector_store %arg5[%c0_160, %c0_161], %486 {strides = array<i32>} : memref<8x144xf32, #tpu.memory_space<vmem>>, vector<8x144xf32>,
    return
  }
}

</mosaic_0001>

<llo_original>
// kernel: tpu_custom_call.1
$region0: #{tpu_custom_call.1}
  #allocation0 [shape = 'u32[]', space=smem, size = 0x4, offset = 0x4, fixed_abs, tag = 'smem constant byte address 0x4 - core index']
  #allocation1 [shape = 'u32[72,128]{1,0:T(1,128)}', space=vmem, size = 0x9000, scoped, tag = 'internal scratch']
  %s0 = inlined_call_operand.vmem [shape: s32[64,1], index: 0, kind: input, shape index: {}]
  %s1 = inlined_call_operand.vmem [shape: f32[8,8], index: 1, kind: input, shape index: {}]
  %s2 = inlined_call_operand.vmem [shape: f32[8,128], index: 2, kind: input, shape index: {}]
  %s3 = inlined_call_operand.hbm [shape: f32[168,128], index: 3, kind: input, shape index: {}]
  %s4 = inlined_call_operand.vmem [shape: f32[96,16], index: 4, kind: input, shape index: {}]
  %s5 = inlined_call_operand.hbm [shape: f32[8,144], index: 5, kind: output, shape index: {}]
  %s6 = sld [smem:[#allocation0]]
  $region34: #{tpu_custom_call.1} parent=0
    _
  %s8 = ssub.s32 1, %s6
  %s9 = scalar_select 0, %s8, %s6
  $region1: #{tpu_custom_call.1} parent=0
    #allocation2 [shape = 'u8[86016]{0}', space=vmem, size = 0x15000, scoped, tag = 'input window, operand 3, single buffered']
    #allocation3 [shape = 's32[1]{0}', space=sflag, size = 0x4, scoped, tag = 'scoped memory for tpu_custom_call.1']
    #allocation4 [shape = 's32[1]{0}', space=sflag, size = 0x4, scoped, tag = 'scoped memory for tpu_custom_call.1']
    #allocation5 [shape = 'u8[8192]{0}', space=vmem, size = 0x2000, scoped, tag = 'output window, operand 0, single buffered']
    %10 = vsyncpa [#allocation3], 0
    %11 = vsyncpa [#allocation4], 0
    // Predicated region
    $region2: #{tpu_custom_call.1} parent=1 // pred_check
      _
    $region3: #{tpu_custom_call.1} parent=1 // pred_check_branch
      %13 = sbr.rel (0) target = $region5
    $region4: #{tpu_custom_call.1} parent=1 // pred_region
      _
    $region5: #{tpu_custom_call.1} parent=1 // pred_fallthru
      _
    // Predicated region
    $region6: #{tpu_custom_call.1} parent=1 // pred_check
      _
    $region7: #{tpu_custom_call.1} parent=1 // pred_check_branch
      %15 = sbr.rel (0) target = $region9
    $region8: #{tpu_custom_call.1} parent=1 // pred_region
      _
    $region9: #{tpu_custom_call.1} parent=1 // pred_fallthru
      _
    // Predicated region
    $region10: #{tpu_custom_call.1} parent=1 // pred_check
      _
    $region11: #{tpu_custom_call.1} parent=1 // pred_check_branch
      %17 = sbr.rel (0) target = $region13
    $region12: #{tpu_custom_call.1} parent=1 // pred_region
      _
    $region13: #{tpu_custom_call.1} parent=1 // pred_fallthru
      _
    // Predicated region
    $region14: #{tpu_custom_call.1} parent=1 // pred_check
      _
    $region15: #{tpu_custom_call.1} parent=1 // pred_check_branch
      %19 = sbr.rel (0) target = $region17
    $region16: #{tpu_custom_call.1} parent=1 // pred_region
      %21 = vsyncadd [#allocation3], 0
      %s22 = sshll.u32 %s3, 4
      %s23 = int_to_ptr.hbm [resolvable:$true] %s22
      %s24 = sshll.u32 [#allocation2], 4
      %s25 = int_to_ptr.vmem [resolvable:$true] %s24
      %30 = dma.hbm_to_vmem [thread:$0]  %s23, 2688, %s25, [#allocation3], 128, 128, 8
    $region17: #{tpu_custom_call.1} parent=1 // pred_fallthru
      _
    // Predicated region
    $region18: #{tpu_custom_call.1} parent=1 // pred_check
      _
    $region19: #{tpu_custom_call.1} parent=1 // pred_check_branch
      %32 = sbr.rel (0) target = $region21
    $region20: #{tpu_custom_call.1} parent=1 // pred_region
      _
    $region21: #{tpu_custom_call.1} parent=1 // pred_fallthru
      _
    // Predicated region
    $region22: #{tpu_custom_call.1} parent=1 // pred_check
      _
    $region23: #{tpu_custom_call.1} parent=1 // pred_check_branch
      %34 = sbr.rel (0) target = $region25
    $region24: #{tpu_custom_call.1} parent=1 // pred_region
      %36 = dma.done [#allocation3], 2688
    $region25: #{tpu_custom_call.1} parent=1 // pred_fallthru
      _
    %v37 = vld [vmem:[%s2] sm:$0xff]
    %v38 = vld [vmem:[#allocation2 + $0x38] sm:$0xff]
    %v39 = vld [vmem:[#allocation2 + $0x40] sm:$0xff]
    %v40 = vld [vmem:[#allocation2 + $0x48] sm:$0xff]
    %v41 = vld [vmem:[#allocation2 + $0x50] sm:$0xff]
    %v42 = vld [vmem:[#allocation2 + $0x58] sm:$0xff]
    %v43 = vld [vmem:[#allocation2 + $0x60] sm:$0xff]
    %v44 = vld [vmem:[#allocation2 + $0x68] sm:$0xff]
    %v45 = vld [vmem:[#allocation2 + $0x70] sm:$0xff]
    %v46 = vld [vmem:[#allocation2 + $0x78] sm:$0xff]
    %v47 = vld [vmem:[#allocation2 + $0x80] sm:$0xff]
    %v48 = vld [vmem:[#allocation2 + $0x88] sm:$0xff]
    %v49 = vld [vmem:[#allocation2 + $0x90] sm:$0xff]
    %v50 = vld [vmem:[#allocation2 + $0x98] sm:$0x1]
    %v51 = vld [vmem:[#allocation2 + $0xa0] sm:$0x1]
    %v52 = vld [vmem:[%s0] sm:$0xff]
    %v53 = vld [vmem:[%s0 + $0x8] sm:$0xff]
    %v54 = vld [vmem:[%s0 + $0x10] sm:$0xff]
    %v55 = vld [vmem:[%s0 + $0x18] sm:$0xff]
    %v56 = vld [vmem:[%s0 + $0x20] sm:$0xff]
    %v57 = vld [vmem:[%s0 + $0x28] sm:$0xff]
    %v58 = vld [vmem:[%s0 + $0x30] sm:$0xff]
    %v59 = vld [vmem:[%s0 + $0x38] sm:$0xff]
    %v60 = vlaneseq
    %v61 = vand.u32 %v60, 127
    %62 = vset.pattern.permute.xlu0 0
    %63 = vperm.xlu0 %62, %v52
    %v64 = vpop.permute.xlu0 %63
    %65 = vset.pattern.permute.xlu0 0
    %66 = vperm.xlu0 %65, %v53
    %v67 = vpop.permute.xlu0 %66
    %68 = vset.pattern.permute.xlu0 0
    %69 = vperm.xlu0 %68, %v54
    %v70 = vpop.permute.xlu0 %69
    %71 = vset.pattern.permute.xlu0 0
    %72 = vperm.xlu0 %71, %v55
    %v73 = vpop.permute.xlu0 %72
    %74 = vset.pattern.permute.xlu0 0
    %75 = vperm.xlu0 %74, %v56
    %v76 = vpop.permute.xlu0 %75
    %77 = vset.pattern.permute.xlu0 0
    %78 = vperm.xlu0 %77, %v57
    %v79 = vpop.permute.xlu0 %78
    %80 = vset.pattern.permute.xlu0 0
    %81 = vperm.xlu0 %80, %v58
    %v82 = vpop.permute.xlu0 %81
    %83 = vset.pattern.permute.xlu0 0
    %84 = vperm.xlu0 %83, %v59
    %v85 = vpop.permute.xlu0 %84
    %vm86 = vcmp.eq.s32.totalorder %v61, %v64
    %vm87 = vcmp.eq.s32.totalorder %v61, %v67
    %vm88 = vcmp.eq.s32.totalorder %v61, %v70
    %vm89 = vcmp.eq.s32.totalorder %v61, %v73
    %vm90 = vcmp.eq.s32.totalorder %v61, %v76
    %vm91 = vcmp.eq.s32.totalorder %v61, %v79
    %vm92 = vcmp.eq.s32.totalorder %v61, %v82
    %vm93 = vcmp.eq.s32.totalorder %v61, %v85
    %v94 = vsel %vm86, 1, 0
    %v95 = vsel %vm87, 1, 0
    %v96 = vsel %vm88, 1, 0
    %v97 = vsel %vm89, 1, 0
    %v98 = vsel %vm90, 1, 0
    %v99 = vsel %vm91, 1, 0
    %v100 = vsel %vm92, 1, 0
    %v101 = vsel %vm93, 1, 0
    %v102 = vcvt.s32.f32 %v94
    %v103 = vcvt.s32.f32 %v95
    %v104 = vcvt.s32.f32 %v96
    %v105 = vcvt.s32.f32 %v97
    %v106 = vcvt.s32.f32 %v98
    %v107 = vcvt.s32.f32 %v99
    %v108 = vcvt.s32.f32 %v100
    %v109 = vcvt.s32.f32 %v101
    %v110 = vld [vmem:[#allocation2] sm:$0xff]
    %v111 = vld [vmem:[#allocation2 + $0x8] sm:$0xff]
    %v112 = vld [vmem:[#allocation2 + $0x10] sm:$0xff]
    %v113 = vld [vmem:[#allocation2 + $0x18] sm:$0xff]
    %v114 = vld [vmem:[#allocation2 + $0x20] sm:$0xff]
    %v115 = vld [vmem:[#allocation2 + $0x28] sm:$0xff]
    %v116 = vld [vmem:[#allocation2 + $0x30] sm:$0xff]
    %v117 = vperm.slane %v50, 0
    %vm118 = vcmask 457728
    %v120 = vsel %vm118, %v102, 0
    %v123 = vsel %vm118, %v103, 0
    %v126 = vsel %vm118, %v104, 0
    %v129 = vsel %vm118, %v105, 0
    %v132 = vsel %vm118, %v106, 0
    %v135 = vsel %vm118, %v107, 0
    %v138 = vsel %vm118, %v108, 0
    %v141 = vsel %vm118, %v109, 0
    %143 = vmatpush.msra.mxu0 0.0
    %144 = vmatpush.msra.mxu0 0.0
    %145 = vmatpush.msra.mxu0 0.0
    %146 = vmatpush.msra.mxu0 0.0
    %147 = vmatpush.msra.mxu0 0.0
    %148 = vmatpush.msra.mxu0 0.0
    %149 = vmatpush.msra.mxu0 0.0
    %150 = vmatpush.msra.mxu0 0.0
    %151 = vmatpush.msra.mxu0 0.0
    %152 = vmatpush.msra.mxu0 %v116
    %153 = vmatpush.msra.mxu0 %v115
    %154 = vmatpush.msra.mxu0 %v114
    %155 = vmatpush.msra.mxu0 %v113
    %156 = vmatpush.msra.mxu0 %v112
    %157 = vmatpush.msra.mxu0 %v111
    %158 = vmatpush.msra.mxu0 %v110
    %159 = vmatmul.f32.gmra.mxu0 %v120
    %v160 = vpop.f32.mrf.mxu0
    %v161 = vadd.f32 %v117, %v160
    %162 = vmatmul.f32.gmra.mxu0 %v123
    %v163 = vpop.f32.mrf.mxu0
    %v164 = vadd.f32 %v117, %v163
    %165 = vmatmul.f32.gmra.mxu0 %v126
    %v166 = vpop.f32.mrf.mxu0
    %v167 = vadd.f32 %v117, %v166
    %168 = vmatmul.f32.gmra.mxu0 %v129
    %v169 = vpop.f32.mrf.mxu0
    %v170 = vadd.f32 %v117, %v169
    %171 = vmatmul.f32.gmra.mxu0 %v132
    %v172 = vpop.f32.mrf.mxu0
    %v173 = vadd.f32 %v117, %v172
    %174 = vmatmul.f32.gmra.mxu0 %v135
    %v175 = vpop.f32.mrf.mxu0
    %v176 = vadd.f32 %v117, %v175
    %177 = vmatmul.f32.gmra.mxu0 %v138
    %v178 = vpop.f32.mrf.mxu0
    %v179 = vadd.f32 %v117, %v178
    %180 = vmatmul.f32.gmra.mxu0 %v141
    %v181 = vpop.f32.mrf.mxu0
    %v182 = vadd.f32 %v117, %v181
    %183 = vdwg.mxu0
    %vm184 = vcmask 261120
    %v186 = vsel %vm184, %v37, 0
    %188 = vmatpush.msra.mxu0 0.0
    %189 = vmatpush.msra.mxu0 0.0
    %190 = vmatpush.msra.mxu0 0.0
    %191 = vmatpush.msra.mxu0 0.0
    %192 = vmatpush.msra.mxu0 0.0
    %193 = vmatpush.msra.mxu0 0.0
    %194 = vmatpush.msra.mxu0 0.0
    %195 = vmatpush.msra.mxu0 0.0
    %196 = vmatpush.msra.mxu0 0.0
    %197 = vmatpush.msra.mxu0 0.0
    %198 = vmatpush.msra.mxu0 0.0
    %199 = vmatpush.msra.mxu0 0.0
    %200 = vmatpush.msra.mxu0 %v41
    %201 = vmatpush.msra.mxu0 %v40
    %202 = vmatpush.msra.mxu0 %v39
    %203 = vmatpush.msra.mxu0 %v38
    %204 = vmatmul.f32.gmra.mxu0 %v186
    %v205 = vpop.f32.mrf.mxu0
    %v206 = vadd.f32 0.0, %v205
    %207 = vdwg.mxu0
    %v208 = vadd.f32 %v161, %v206
    %v209 = vmul.f32 %v208, 0.5
    %v210 = vtanh.pop %v209
    %v211 = vadd.f32 %v210, 1.0
    %v212 = vmul.f32 %v211, 0.5
    %213 = vrot.lane.b32.xlu0 %v37, 96
    %v214 = vpop.permute.xlu0 %213
    %v216 = vmul.f32 %v212, %v214
    %218 = vrot.lane.b32.xlu0 %v210, 64
    %v219 = vpop.permute.xlu0 %218
    %v221 = vmul.f32 %v212, %v219
    %223 = vrot.lane.b32.xlu0 %v221, 32
    %v224 = vpop.permute.xlu0 %223
    %v226 = vadd.f32 %v216, %v224
    %v227 = vtanh.pop %v226
    %229 = vrot.lane.b32.xlu0 %v227, 64
    %v230 = vpop.permute.xlu0 %229
    %v232 = vmul.f32 %v212, %v230
    %234 = vrot.lane.b32.xlu0 %v232, 32
    %v235 = vpop.permute.xlu0 %234
    %v237 = vsel %vm184, %v235, %v37
    %v238 = vperm.slane %v51, 0
    %vm239 = vcmask 523264
    %v241 = vsel %vm239, %v237, 0
    %243 = vmatpush.msra.mxu0 0.0
    %244 = vmatpush.msra.mxu0 0.0
    %245 = vmatpush.msra.mxu0 0.0
    %246 = vmatpush.msra.mxu0 0.0
    %247 = vmatpush.msra.mxu0 0.0
    %248 = vmatpush.msra.mxu0 0.0
    %249 = vmatpush.msra.mxu0 0.0
    %250 = vmatpush.msra.mxu0 0.0
    %251 = vmatpush.msra.mxu0 %v49
    %252 = vmatpush.msra.mxu0 %v48
    %253 = vmatpush.msra.mxu0 %v47
    %254 = vmatpush.msra.mxu0 %v46
    %255 = vmatpush.msra.mxu0 %v45
    %256 = vmatpush.msra.mxu0 %v44
    %257 = vmatpush.msra.mxu0 %v43
    %258 = vmatpush.msra.mxu0 %v42
    %259 = vmatmul.f32.gmra.mxu0 %v241
    %v260 = vpop.f32.mrf.mxu0
    %v261 = vadd.f32 %v238, %v260
    %262 = vdwg.mxu0
    %v263 = vmul.f32 %v261, 0.5
    %v264 = vtanh.pop %v263
    %v265 = vadd.f32 %v264, 1.0
    %v266 = vmul.f32 %v265, 0.5
    %267 = vrot.lane.b32.xlu0 %v37, 64
    %v268 = vpop.permute.xlu0 %267
    %v270 = vmul.f32 %v266, %v268
    %272 = vrot.lane.b32.xlu0 %v264, 64
    %v273 = vpop.permute.xlu0 %272
    %v275 = vmul.f32 %v266, %v273
    %277 = vrot.lane.b32.xlu0 %v275, 32
    %v278 = vpop.permute.xlu0 %277
    %v280 = vadd.f32 %v270, %v278
    %v281 = vtanh.pop %v280
    %283 = vrot.lane.b32.xlu0 %v281, 64
    %v284 = vpop.permute.xlu0 %283
    %v286 = vmul.f32 %v266, %v284
    %v287 = vsel %vm184, %v235, 0
    %289 = vmatpush.msra.mxu0 0.0
    %290 = vmatpush.msra.mxu0 0.0
    %291 = vmatpush.msra.mxu0 0.0
    %292 = vmatpush.msra.mxu0 0.0
    %293 = vmatpush.msra.mxu0 0.0
    %294 = vmatpush.msra.mxu0 0.0
    %295 = vmatpush.msra.mxu0 0.0
    %296 = vmatpush.msra.mxu0 0.0
    %297 = vmatpush.msra.mxu0 0.0
    %298 = vmatpush.msra.mxu0 0.0
    %299 = vmatpush.msra.mxu0 0.0
    %300 = vmatpush.msra.mxu0 0.0
    %301 = vmatpush.msra.mxu0 %v41
    %302 = vmatpush.msra.mxu0 %v40
    %303 = vmatpush.msra.mxu0 %v39
    %304 = vmatpush.msra.mxu0 %v38
    %305 = vmatmul.f32.gmra.mxu0 %v287
    %v306 = vpop.f32.mrf.mxu0
    %v307 = vadd.f32 0.0, %v306
    %308 = vdwg.mxu0
    %v309 = vadd.f32 %v164, %v307
    %v310 = vmul.f32 %v309, 0.5
    %v311 = vtanh.pop %v310
    %v312 = vadd.f32 %v311, 1.0
    %v313 = vmul.f32 %v312, 0.5
    %v314 = vmul.f32 %v313, %v226
    %316 = vrot.lane.b32.xlu0 %v311, 64
    %v317 = vpop.permute.xlu0 %316
    %v319 = vmul.f32 %v313, %v317
    %321 = vrot.lane.b32.xlu0 %v319, 32
    %v322 = vpop.permute.xlu0 %321
    %v324 = vadd.f32 %v314, %v322
    %v325 = vtanh.pop %v324
    %327 = vrot.lane.b32.xlu0 %v325, 64
    %v328 = vpop.permute.xlu0 %327
    %v330 = vmul.f32 %v313, %v328
    %332 = vrot.lane.b32.xlu0 %v330, 32
    %v333 = vpop.permute.xlu0 %332
    %336 = vrot.lane.b32.xlu0 %v286, 64
    %v337 = vpop.permute.xlu0 %336
    %v339 = vsel %vm184, %v333, %v337
    %v341 = vsel %vm239, %v339, 0
    %343 = vmatpush.msra.mxu0 0.0
    %344 = vmatpush.msra.mxu0 0.0
    %345 = vmatpush.msra.mxu0 0.0
    %346 = vmatpush.msra.mxu0 0.0
    %347 = vmatpush.msra.mxu0 0.0
    %348 = vmatpush.msra.mxu0 0.0
    %349 = vmatpush.msra.mxu0 0.0
    %350 = vmatpush.msra.mxu0 0.0
    %351 = vmatpush.msra.mxu0 %v49
    %352 = vmatpush.msra.mxu0 %v48
    %353 = vmatpush.msra.mxu0 %v47
    %354 = vmatpush.msra.mxu0 %v46
    %355 = vmatpush.msra.mxu0 %v45
    %356 = vmatpush.msra.mxu0 %v44
    %357 = vmatpush.msra.mxu0 %v43
    %358 = vmatpush.msra.mxu0 %v42
    %359 = vmatmul.f32.gmra.mxu0 %v341
    %v360 = vpop.f32.mrf.mxu0
    %v361 = vadd.f32 %v238, %v360
    %362 = vdwg.mxu0
    %v363 = vmul.f32 %v361, 0.5
    %v364 = vtanh.pop %v363
    %v365 = vadd.f32 %v364, 1.0
    %v366 = vmul.f32 %v365, 0.5
    %v367 = vmul.f32 %v366, %v280
    %369 = vrot.lane.b32.xlu0 %v364, 64
    %v370 = vpop.permute.xlu0 %369
    %v372 = vmul.f32 %v366, %v370
    %374 = vrot.lane.b32.xlu0 %v372, 32
    %v375 = vpop.permute.xlu0 %374
    %v377 = vadd.f32 %v367, %v375
    %v378 = vtanh.pop %v377
    %380 = vrot.lane.b32.xlu0 %v378, 64
    %v381 = vpop.permute.xlu0 %380
    %v383 = vmul.f32 %v366, %v381
    %v384 = vsel %vm184, %v333, 0
    %386 = vmatpush.msra.mxu0 0.0
    %387 = vmatpush.msra.mxu0 0.0
    %388 = vmatpush.msra.mxu0 0.0
    %389 = vmatpush.msra.mxu0 0.0
    %390 = vmatpush.msra.mxu0 0.0
    %391 = vmatpush.msra.mxu0 0.0
    %392 = vmatpush.msra.mxu0 0.0
    %393 = vmatpush.msra.mxu0 0.0
    %394 = vmatpush.msra.mxu0 0.0
    %395 = vmatpush.msra.mxu0 0.0
    %396 = vmatpush.msra.mxu0 0.0
    %397 = vmatpush.msra.mxu0 0.0
    %398 = vmatpush.msra.mxu0 %v41
    %399 = vmatpush.msra.mxu0 %v40
    %400 = vmatpush.msra.mxu0 %v39
    %401 = vmatpush.msra.mxu0 %v38
    %402 = vmatmul.f32.gmra.mxu0 %v384
    %v403 = vpop.f32.mrf.mxu0
    %v404 = vadd.f32 0.0, %v403
    %405 = vdwg.mxu0
    %v406 = vadd.f32 %v167, %v404
    %v407 = vmul.f32 %v406, 0.5
    %v408 = vtanh.pop %v407
    %v409 = vadd.f32 %v408, 1.0
    %v410 = vmul.f32 %v409, 0.5
    %v411 = vmul.f32 %v410, %v324
    %413 = vrot.lane.b32.xlu0 %v408, 64
    %v414 = vpop.permute.xlu0 %413
    %v416 = vmul.f32 %v410, %v414
    %418 = vrot.lane.b32.xlu0 %v416, 32
    %v419 = vpop.permute.xlu0 %418
    %v421 = vadd.f32 %v411, %v419
    %v422 = vtanh.pop %v421
    %424 = vrot.lane.b32.xlu0 %v422, 64
    %v425 = vpop.permute.xlu0 %424
    %v427 = vmul.f32 %v410, %v425
    %429 = vrot.lane.b32.xlu0 %v427, 32
    %v430 = vpop.permute.xlu0 %429
    %433 = vrot.lane.b32.xlu0 %v383, 64
    %v434 = vpop.permute.xlu0 %433
    %v436 = vsel %vm184, %v430, %v434
    %v438 = vsel %vm239, %v436, 0
    %440 = vmatpush.msra.mxu0 0.0
    %441 = vmatpush.msra.mxu0 0.0
    %442 = vmatpush.msra.mxu0 0.0
    %443 = vmatpush.msra.mxu0 0.0
    %444 = vmatpush.msra.mxu0 0.0
    %445 = vmatpush.msra.mxu0 0.0
    %446 = vmatpush.msra.mxu0 0.0
    %447 = vmatpush.msra.mxu0 0.0
    %448 = vmatpush.msra.mxu0 %v49
    %449 = vmatpush.msra.mxu0 %v48
    %450 = vmatpush.msra.mxu0 %v47
    %451 = vmatpush.msra.mxu0 %v46
    %452 = vmatpush.msra.mxu0 %v45
    %453 = vmatpush.msra.mxu0 %v44
    %454 = vmatpush.msra.mxu0 %v43
    %455 = vmatpush.msra.mxu0 %v42
    %456 = vmatmul.f32.gmra.mxu0 %v438
    %v457 = vpop.f32.mrf.mxu0
    %v458 = vadd.f32 %v238, %v457
    %459 = vdwg.mxu0
    %v460 = vmul.f32 %v458, 0.5
    %v461 = vtanh.pop %v460
    %v462 = vadd.f32 %v461, 1.0
    %v463 = vmul.f32 %v462, 0.5
    %v464 = vmul.f32 %v463, %v377
    %466 = vrot.lane.b32.xlu0 %v461, 64
    %v467 = vpop.permute.xlu0 %466
    %v469 = vmul.f32 %v463, %v467
    %471 = vrot.lane.b32.xlu0 %v469, 32
    %v472 = vpop.permute.xlu0 %471
    %v474 = vadd.f32 %v464, %v472
    %v475 = vtanh.pop %v474
    %477 = vrot.lane.b32.xlu0 %v475, 64
    %v478 = vpop.permute.xlu0 %477
    %v480 = vmul.f32 %v463, %v478
    %v481 = vsel %vm184, %v430, 0
    %483 = vmatpush.msra.mxu0 0.0
    %484 = vmatpush.msra.mxu0 0.0
    %485 = vmatpush.msra.mxu0 0.0
    %486 = vmatpush.msra.mxu0 0.0
    %487 = vmatpush.msra.mxu0 0.0
    %488 = vmatpush.msra.mxu0 0.0
    %489 = vmatpush.msra.mxu0 0.0
    %490 = vmatpush.msra.mxu0 0.0
    %491 = vmatpush.msra.mxu0 0.0
    %492 = vmatpush.msra.mxu0 0.0
    %493 = vmatpush.msra.mxu0 0.0
    %494 = vmatpush.msra.mxu0 0.0
    %495 = vmatpush.msra.mxu0 %v41
    %496 = vmatpush.msra.mxu0 %v40
    %497 = vmatpush.msra.mxu0 %v39
    %498 = vmatpush.msra.mxu0 %v38
    %499 = vmatmul.f32.gmra.mxu0 %v481
    %v500 = vpop.f32.mrf.mxu0
    %v501 = vadd.f32 0.0, %v500
    %502 = vdwg.mxu0
    %v503 = vadd.f32 %v170, %v501
    %v504 = vmul.f32 %v503, 0.5
    %v505 = vtanh.pop %v504
    %v506 = vadd.f32 %v505, 1.0
    %v507 = vmul.f32 %v506, 0.5
    %v508 = vmul.f32 %v507, %v421
    %510 = vrot.lane.b32.xlu0 %v505, 64
    %v511 = vpop.permute.xlu0 %510
    %v513 = vmul.f32 %v507, %v511
    %515 = vrot.lane.b32.xlu0 %v513, 32
    %v516 = vpop.permute.xlu0 %515
    %v518 = vadd.f32 %v508, %v516
    %v519 = vtanh.pop %v518
    %521 = vrot.lane.b32.xlu0 %v519, 64
    %v522 = vpop.permute.xlu0 %521
    %v524 = vmul.f32 %v507, %v522
    %526 = vrot.lane.b32.xlu0 %v524, 32
    %v527 = vpop.permute.xlu0 %526
    %530 = vrot.lane.b32.xlu0 %v480, 64
    %v531 = vpop.permute.xlu0 %530
    %v533 = vsel %vm184, %v527, %v531
    %v535 = vsel %vm239, %v533, 0
    %537 = vmatpush.msra.mxu0 0.0
    %538 = vmatpush.msra.mxu0 0.0
    %539 = vmatpush.msra.mxu0 0.0
    %540 = vmatpush.msra.mxu0 0.0
    %541 = vmatpush.msra.mxu0 0.0
    %542 = vmatpush.msra.mxu0 0.0
    %543 = vmatpush.msra.mxu0 0.0
    %544 = vmatpush.msra.mxu0 0.0
    %545 = vmatpush.msra.mxu0 %v49
    %546 = vmatpush.msra.mxu0 %v48
    %547 = vmatpush.msra.mxu0 %v47
    %548 = vmatpush.msra.mxu0 %v46
    %549 = vmatpush.msra.mxu0 %v45
    %550 = vmatpush.msra.mxu0 %v44
    %551 = vmatpush.msra.mxu0 %v43
    %552 = vmatpush.msra.mxu0 %v42
    %553 = vmatmul.f32.gmra.mxu0 %v535
    %v554 = vpop.f32.mrf.mxu0
    %v555 = vadd.f32 %v238, %v554
    %556 = vdwg.mxu0
    %v557 = vmul.f32 %v555, 0.5
    %v558 = vtanh.pop %v557
    %v559 = vadd.f32 %v558, 1.0
    %v560 = vmul.f32 %v559, 0.5
    %v561 = vmul.f32 %v560, %v474
    %563 = vrot.lane.b32.xlu0 %v558, 64
    %v564 = vpop.permute.xlu0 %563
    %v566 = vmul.f32 %v560, %v564
    %568 = vrot.lane.b32.xlu0 %v566, 32
    %v569 = vpop.permute.xlu0 %568
    %v571 = vadd.f32 %v561, %v569
    %v572 = vtanh.pop %v571
    %574 = vrot.lane.b32.xlu0 %v572, 64
    %v575 = vpop.permute.xlu0 %574
    %v577 = vmul.f32 %v560, %v575
    %v578 = vsel %vm184, %v527, 0
    %580 = vmatpush.msra.mxu0 0.0
    %581 = vmatpush.msra.mxu0 0.0
    %582 = vmatpush.msra.mxu0 0.0
    %583 = vmatpush.msra.mxu0 0.0
    %584 = vmatpush.msra.mxu0 0.0
    %585 = vmatpush.msra.mxu0 0.0
    %586 = vmatpush.msra.mxu0 0.0
    %587 = vmatpush.msra.mxu0 0.0
    %588 = vmatpush.msra.mxu0 0.0
    %589 = vmatpush.msra.mxu0 0.0
    %590 = vmatpush.msra.mxu0 0.0
    %591 = vmatpush.msra.mxu0 0.0
    %592 = vmatpush.msra.mxu0 %v41
    %593 = vmatpush.msra.mxu0 %v40
    %594 = vmatpush.msra.mxu0 %v39
    %595 = vmatpush.msra.mxu0 %v38
    %596 = vmatmul.f32.gmra.mxu0 %v578
    %v597 = vpop.f32.mrf.mxu0
    %v598 = vadd.f32 0.0, %v597
    %599 = vdwg.mxu0
    %v600 = vadd.f32 %v173, %v598
    %v601 = vmul.f32 %v600, 0.5
    %v602 = vtanh.pop %v601
    %v603 = vadd.f32 %v602, 1.0
    %v604 = vmul.f32 %v603, 0.5
    %v605 = vmul.f32 %v604, %v518
    %607 = vrot.lane.b32.xlu0 %v602, 64
    %v608 = vpop.permute.xlu0 %607
    %v610 = vmul.f32 %v604, %v608
    %612 = vrot.lane.b32.xlu0 %v610, 32
    %v613 = vpop.permute.xlu0 %612
    %v615 = vadd.f32 %v605, %v613
    %v616 = vtanh.pop %v615
    %618 = vrot.lane.b32.xlu0 %v616, 64
    %v619 = vpop.permute.xlu0 %618
    %v621 = vmul.f32 %v604, %v619
    %623 = vrot.lane.b32.xlu0 %v621, 32
    %v624 = vpop.permute.xlu0 %623
    %627 = vrot.lane.b32.xlu0 %v577, 64
    %v628 = vpop.permute.xlu0 %627
    %v630 = vsel %vm184, %v624, %v628
    %v632 = vsel %vm239, %v630, 0
    %634 = vmatpush.msra.mxu0 0.0
    %635 = vmatpush.msra.mxu0 0.0
    %636 = vmatpush.msra.mxu0 0.0
    %637 = vmatpush.msra.mxu0 0.0
    %638 = vmatpush.msra.mxu0 0.0
    %639 = vmatpush.msra.mxu0 0.0
    %640 = vmatpush.msra.mxu0 0.0
    %641 = vmatpush.msra.mxu0 0.0
    %642 = vmatpush.msra.mxu0 %v49
    %643 = vmatpush.msra.mxu0 %v48
    %644 = vmatpush.msra.mxu0 %v47
    %645 = vmatpush.msra.mxu0 %v46
    %646 = vmatpush.msra.mxu0 %v45
    %647 = vmatpush.msra.mxu0 %v44
    %648 = vmatpush.msra.mxu0 %v43
    %649 = vmatpush.msra.mxu0 %v42
    %650 = vmatmul.f32.gmra.mxu0 %v632
    %v651 = vpop.f32.mrf.mxu0
    %v652 = vadd.f32 %v238, %v651
    %653 = vdwg.mxu0
    %v654 = vmul.f32 %v652, 0.5
    %v655 = vtanh.pop %v654
    %v656 = vadd.f32 %v655, 1.0
    %v657 = vmul.f32 %v656, 0.5
    %v658 = vmul.f32 %v657, %v571
    %660 = vrot.lane.b32.xlu0 %v655, 64
    %v661 = vpop.permute.xlu0 %660
    %v663 = vmul.f32 %v657, %v661
    %665 = vrot.lane.b32.xlu0 %v663, 32
    %v666 = vpop.permute.xlu0 %665
    %v668 = vadd.f32 %v658, %v666
    %v669 = vtanh.pop %v668
    %671 = vrot.lane.b32.xlu0 %v669, 64
    %v672 = vpop.permute.xlu0 %671
    %v674 = vmul.f32 %v657, %v672
    %v675 = vsel %vm184, %v624, 0
    %677 = vmatpush.msra.mxu0 0.0
    %678 = vmatpush.msra.mxu0 0.0
    %679 = vmatpush.msra.mxu0 0.0
    %680 = vmatpush.msra.mxu0 0.0
    %681 = vmatpush.msra.mxu0 0.0
    %682 = vmatpush.msra.mxu0 0.0
    %683 = vmatpush.msra.mxu0 0.0
    %684 = vmatpush.msra.mxu0 0.0
    %685 = vmatpush.msra.mxu0 0.0
    %686 = vmatpush.msra.mxu0 0.0
    %687 = vmatpush.msra.mxu0 0.0
    %688 = vmatpush.msra.mxu0 0.0
    %689 = vmatpush.msra.mxu0 %v41
    %690 = vmatpush.msra.mxu0 %v40
    %691 = vmatpush.msra.mxu0 %v39
    %692 = vmatpush.msra.mxu0 %v38
    %693 = vmatmul.f32.gmra.mxu0 %v675
    %v694 = vpop.f32.mrf.mxu0
    %v695 = vadd.f32 0.0, %v694
    %696 = vdwg.mxu0
    %v697 = vadd.f32 %v176, %v695
    %v698 = vmul.f32 %v697, 0.5
    %v699 = vtanh.pop %v698
    %v700 = vadd.f32 %v699, 1.0
    %v701 = vmul.f32 %v700, 0.5
    %v702 = vmul.f32 %v701, %v615
    %704 = vrot.lane.b32.xlu0 %v699, 64
    %v705 = vpop.permute.xlu0 %704
    %v707 = vmul.f32 %v701, %v705
    %709 = vrot.lane.b32.xlu0 %v707, 32
    %v710 = vpop.permute.xlu0 %709
    %v712 = vadd.f32 %v702, %v710
    %v713 = vtanh.pop %v712
    %715 = vrot.lane.b32.xlu0 %v713, 64
    %v716 = vpop.permute.xlu0 %715
    %v718 = vmul.f32 %v701, %v716
    %720 = vrot.lane.b32.xlu0 %v718, 32
    %v721 = vpop.permute.xlu0 %720
    %724 = vrot.lane.b32.xlu0 %v674, 64
    %v725 = vpop.permute.xlu0 %724
    %v727 = vsel %vm184, %v721, %v725
    %v729 = vsel %vm239, %v727, 0
    %731 = vmatpush.msra.mxu0 0.0
    %732 = vmatpush.msra.mxu0 0.0
    %733 = vmatpush.msra.mxu0 0.0
    %734 = vmatpush.msra.mxu0 0.0
    %735 = vmatpush.msra.mxu0 0.0
    %736 = vmatpush.msra.mxu0 0.0
    %737 = vmatpush.msra.mxu0 0.0
    %738 = vmatpush.msra.mxu0 0.0
    %739 = vmatpush.msra.mxu0 %v49
    %740 = vmatpush.msra.mxu0 %v48
    %741 = vmatpush.msra.mxu0 %v47
    %742 = vmatpush.msra.mxu0 %v46
    %743 = vmatpush.msra.mxu0 %v45
    %744 = vmatpush.msra.mxu0 %v44
    %745 = vmatpush.msra.mxu0 %v43
    %746 = vmatpush.msra.mxu0 %v42
    %747 = vmatmul.f32.gmra.mxu0 %v729
    %v748 = vpop.f32.mrf.mxu0
    %v749 = vadd.f32 %v238, %v748
    %750 = vdwg.mxu0
    %v751 = vmul.f32 %v749, 0.5
    %v752 = vtanh.pop %v751
    %v753 = vadd.f32 %v752, 1.0
    %v754 = vmul.f32 %v753, 0.5
    %v755 = vmul.f32 %v754, %v668
    %757 = vrot.lane.b32.xlu0 %v752, 64
    %v758 = vpop.permute.xlu0 %757
    %v760 = vmul.f32 %v754, %v758
    %762 = vrot.lane.b32.xlu0 %v760, 32
    %v763 = vpop.permute.xlu0 %762
    %v765 = vadd.f32 %v755, %v763
    %v766 = vtanh.pop %v765
    %768 = vrot.lane.b32.xlu0 %v766, 64
    %v769 = vpop.permute.xlu0 %768
    %v771 = vmul.f32 %v754, %v769
    %v772 = vsel %vm184, %v721, 0
    %774 = vmatpush.msra.mxu0 0.0
    %775 = vmatpush.msra.mxu0 0.0
    %776 = vmatpush.msra.mxu0 0.0
    %777 = vmatpush.msra.mxu0 0.0
    %778 = vmatpush.msra.mxu0 0.0
    %779 = vmatpush.msra.mxu0 0.0
    %780 = vmatpush.msra.mxu0 0.0
    %781 = vmatpush.msra.mxu0 0.0
    %782 = vmatpush.msra.mxu0 0.0
    %783 = vmatpush.msra.mxu0 0.0
    %784 = vmatpush.msra.mxu0 0.0
    %785 = vmatpush.msra.mxu0 0.0
    %786 = vmatpush.msra.mxu0 %v41
    %787 = vmatpush.msra.mxu0 %v40
    %788 = vmatpush.msra.mxu0 %v39
    %789 = vmatpush.msra.mxu0 %v38
    %790 = vmatmul.f32.gmra.mxu0 %v772
    %v791 = vpop.f32.mrf.mxu0
    %v792 = vadd.f32 0.0, %v791
    %793 = vdwg.mxu0
    %v794 = vadd.f32 %v179, %v792
    %v795 = vmul.f32 %v794, 0.5
    %v796 = vtanh.pop %v795
    %v797 = vadd.f32 %v796, 1.0
    %v798 = vmul.f32 %v797, 0.5
    %v799 = vmul.f32 %v798, %v712
    %801 = vrot.lane.b32.xlu0 %v796, 64
    %v802 = vpop.permute.xlu0 %801
    %v804 = vmul.f32 %v798, %v802
    %806 = vrot.lane.b32.xlu0 %v804, 32
    %v807 = vpop.permute.xlu0 %806
    %v809 = vadd.f32 %v799, %v807
    %v810 = vtanh.pop %v809
    %812 = vrot.lane.b32.xlu0 %v810, 64
    %v813 = vpop.permute.xlu0 %812
    %v815 = vmul.f32 %v798, %v813
    %817 = vrot.lane.b32.xlu0 %v815, 32
    %v818 = vpop.permute.xlu0 %817
    %821 = vrot.lane.b32.xlu0 %v771, 64
    %v822 = vpop.permute.xlu0 %821
    %v824 = vsel %vm184, %v818, %v822
    %v826 = vsel %vm239, %v824, 0
    %828 = vmatpush.msra.mxu0 0.0
    %829 = vmatpush.msra.mxu0 0.0
    %830 = vmatpush.msra.mxu0 0.0
    %831 = vmatpush.msra.mxu0 0.0
    %832 = vmatpush.msra.mxu0 0.0
    %833 = vmatpush.msra.mxu0 0.0
    %834 = vmatpush.msra.mxu0 0.0
    %835 = vmatpush.msra.mxu0 0.0
    %836 = vmatpush.msra.mxu0 %v49
    %837 = vmatpush.msra.mxu0 %v48
    %838 = vmatpush.msra.mxu0 %v47
    %839 = vmatpush.msra.mxu0 %v46
    %840 = vmatpush.msra.mxu0 %v45
    %841 = vmatpush.msra.mxu0 %v44
    %842 = vmatpush.msra.mxu0 %v43
    %843 = vmatpush.msra.mxu0 %v42
    %844 = vmatmul.f32.gmra.mxu0 %v826
    %v845 = vpop.f32.mrf.mxu0
    %v846 = vadd.f32 %v238, %v845
    %847 = vdwg.mxu0
    %v848 = vmul.f32 %v846, 0.5
    %v849 = vtanh.pop %v848
    %v850 = vadd.f32 %v849, 1.0
    %v851 = vmul.f32 %v850, 0.5
    %v852 = vmul.f32 %v851, %v765
    %854 = vrot.lane.b32.xlu0 %v849, 64
    %v855 = vpop.permute.xlu0 %854
    %v857 = vmul.f32 %v851, %v855
    %859 = vrot.lane.b32.xlu0 %v857, 32
    %v860 = vpop.permute.xlu0 %859
    %v862 = vadd.f32 %v852, %v860
    %v863 = vtanh.pop %v862
    %865 = vrot.lane.b32.xlu0 %v863, 64
    %v866 = vpop.permute.xlu0 %865
    %v868 = vmul.f32 %v851, %v866
    %v869 = vsel %vm184, %v818, 0
    %871 = vmatpush.msra.mxu0 0.0
    %872 = vmatpush.msra.mxu0 0.0
    %873 = vmatpush.msra.mxu0 0.0
    %874 = vmatpush.msra.mxu0 0.0
    %875 = vmatpush.msra.mxu0 0.0
    %876 = vmatpush.msra.mxu0 0.0
    %877 = vmatpush.msra.mxu0 0.0
    %878 = vmatpush.msra.mxu0 0.0
    %879 = vmatpush.msra.mxu0 0.0
    %880 = vmatpush.msra.mxu0 0.0
    %881 = vmatpush.msra.mxu0 0.0
    %882 = vmatpush.msra.mxu0 0.0
    %883 = vmatpush.msra.mxu0 %v41
    %884 = vmatpush.msra.mxu0 %v40
    %885 = vmatpush.msra.mxu0 %v39
    %886 = vmatpush.msra.mxu0 %v38
    %887 = vmatmul.f32.gmra.mxu0 %v869
    %v888 = vpop.f32.mrf.mxu0
    %v889 = vadd.f32 0.0, %v888
    %890 = vdwg.mxu0
    %v891 = vadd.f32 %v182, %v889
    %v892 = vmul.f32 %v891, 0.5
    %v893 = vtanh.pop %v892
    %v894 = vadd.f32 %v893, 1.0
    %v895 = vmul.f32 %v894, 0.5
    %v896 = vmul.f32 %v895, %v809
    %898 = vrot.lane.b32.xlu0 %v893, 64
    %v899 = vpop.permute.xlu0 %898
    %v901 = vmul.f32 %v895, %v899
    %903 = vrot.lane.b32.xlu0 %v901, 32
    %v904 = vpop.permute.xlu0 %903
    %v906 = vadd.f32 %v896, %v904
    %v907 = vtanh.pop %v906
    %909 = vrot.lane.b32.xlu0 %v907, 64
    %v910 = vpop.permute.xlu0 %909
    %v912 = vmul.f32 %v895, %v910
    %914 = vrot.lane.b32.xlu0 %v912, 32
    %v915 = vpop.permute.xlu0 %914
    %918 = vrot.lane.b32.xlu0 %v868, 64
    %v919 = vpop.permute.xlu0 %918
    %v921 = vsel %vm184, %v915, %v919
    %v923 = vsel %vm239, %v921, 0
    %925 = vmatpush.msra.mxu0 0.0
    %926 = vmatpush.msra.mxu0 0.0
    %927 = vmatpush.msra.mxu0 0.0
    %928 = vmatpush.msra.mxu0 0.0
    %929 = vmatpush.msra.mxu0 0.0
    %930 = vmatpush.msra.mxu0 0.0
    %931 = vmatpush.msra.mxu0 0.0
    %932 = vmatpush.msra.mxu0 0.0
    %933 = vmatpush.msra.mxu0 %v49
    %934 = vmatpush.msra.mxu0 %v48
    %935 = vmatpush.msra.mxu0 %v47
    %936 = vmatpush.msra.mxu0 %v46
    %937 = vmatpush.msra.mxu0 %v45
    %938 = vmatpush.msra.mxu0 %v44
    %939 = vmatpush.msra.mxu0 %v43
    %940 = vmatpush.msra.mxu0 %v42
    %941 = vmatmul.f32.gmra.mxu0 %v923
    %v942 = vpop.f32.mrf.mxu0
    %v943 = vadd.f32 %v238, %v942
    %944 = vdwg.mxu0
    %v945 = vmul.f32 %v943, 0.5
    %v946 = vtanh.pop %v945
    %v947 = vadd.f32 %v946, 1.0
    %v948 = vmul.f32 %v947, 0.5
    %v949 = vmul.f32 %v948, %v862
    %951 = vrot.lane.b32.xlu0 %v946, 64
    %v952 = vpop.permute.xlu0 %951
    %v954 = vmul.f32 %v948, %v952
    %956 = vrot.lane.b32.xlu0 %v954, 32
    %v957 = vpop.permute.xlu0 %956
    %v959 = vadd.f32 %v949, %v957
    %v960 = vtanh.pop %v959
    %962 = vrot.lane.b32.xlu0 %v960, 64
    %v963 = vpop.permute.xlu0 %962
    %v965 = vmul.f32 %v948, %v963
    %v966 = vld [vmem:[%s4] sm:$0xff]
    %v967 = vld [vmem:[%s4 + $0x8] sm:$0xff]
    %v968 = vld [vmem:[%s4 + $0x10] sm:$0xff]
    %v969 = vld [vmem:[%s4 + $0x18] sm:$0xff]
    %v970 = vld [vmem:[%s1] sm:$0xff]
    %v971 = vld [vmem:[%s4 + $0x20] sm:$0xff]
    %vm972 = vcmask 64512
    %v974 = vsel %vm972, %v970, 0
    %976 = vmatpush.msra.mxu0 0.0
    %977 = vmatpush.msra.mxu0 0.0
    %978 = vmatpush.msra.mxu0 0.0
    %979 = vmatpush.msra.mxu0 0.0
    %980 = vmatpush.msra.mxu0 0.0
    %981 = vmatpush.msra.mxu0 0.0
    %982 = vmatpush.msra.mxu0 0.0
    %983 = vmatpush.msra.mxu0 0.0
    %984 = vmatpush.msra.mxu0 0.0
    %985 = vmatpush.msra.mxu0 0.0
    %986 = vmatpush.msra.mxu0 0.0
    %987 = vmatpush.msra.mxu0 0.0
    %988 = vmatpush.msra.mxu0 0.0
    %989 = vmatpush.msra.mxu0 0.0
    %990 = vmatpush.msra.mxu0 0.0
    %991 = vmatpush.msra.mxu0 %v971
    %992 = vmatmul.f32.gmra.mxu0 %v974
    %v993 = vpop.f32.mrf.mxu0
    %v994 = vadd.f32 0.0, %v993
    %995 = vdwg.mxu0
    %997 = vrot.lane.b32.xlu0 %v965, 32
    %v998 = vpop.permute.xlu0 %997
    %v999 = vsel %vm184, %v998, 0
    %1001 = vmatpush.msra.mxu0 0.0
    %1002 = vmatpush.msra.mxu0 0.0
    %1003 = vmatpush.msra.mxu0 0.0
    %1004 = vmatpush.msra.mxu0 0.0
    %1005 = vmatpush.msra.mxu0 0.0
    %1006 = vmatpush.msra.mxu0 0.0
    %1007 = vmatpush.msra.mxu0 0.0
    %1008 = vmatpush.msra.mxu0 0.0
    %1009 = vmatpush.msra.mxu0 0.0
    %1010 = vmatpush.msra.mxu0 0.0
    %1011 = vmatpush.msra.mxu0 0.0
    %1012 = vmatpush.msra.mxu0 0.0
    %1013 = vmatpush.msra.mxu0 %v969
    %1014 = vmatpush.msra.mxu0 %v968
    %1015 = vmatpush.msra.mxu0 %v967
    %1016 = vmatpush.msra.mxu0 %v966
    %1017 = vmatmul.f32.gmra.mxu0 %v999
    %v1018 = vpop.f32.mrf.mxu0
    %v1019 = vadd.f32 %v994, %v1018
    %1020 = vdwg.mxu0
    %v1021 = vld [vmem:[%s4 + $0x28] sm:$0x1]
    %v1022 = vperm.slane %v1021, 0
    %v1023 = vadd.f32 %v1019, %v1022
    %v1024 = vmax.f32 %v1023, 0.0
    %v1025 = vld [vmem:[%s4 + $0x30] sm:$0xff]
    %v1026 = vld [vmem:[%s4 + $0x38] sm:$0xff]
    %v1027 = vld [vmem:[%s4 + $0x40] sm:$0x1]
    %v1028 = vperm.slane %v1027, 0
    %vm1029 = vcmask 130048
    %v1031 = vsel %vm1029, %v1024, 0
    %1033 = vmatpush.msra.mxu0 0.0
    %1034 = vmatpush.msra.mxu0 0.0
    %1035 = vmatpush.msra.mxu0 0.0
    %1036 = vmatpush.msra.mxu0 0.0
    %1037 = vmatpush.msra.mxu0 0.0
    %1038 = vmatpush.msra.mxu0 0.0
    %1039 = vmatpush.msra.mxu0 0.0
    %1040 = vmatpush.msra.mxu0 0.0
    %1041 = vmatpush.msra.mxu0 0.0
    %1042 = vmatpush.msra.mxu0 0.0
    %1043 = vmatpush.msra.mxu0 0.0
    %1044 = vmatpush.msra.mxu0 0.0
    %1045 = vmatpush.msra.mxu0 0.0
    %1046 = vmatpush.msra.mxu0 0.0
    %1047 = vmatpush.msra.mxu0 %v1026
    %1048 = vmatpush.msra.mxu0 %v1025
    %1049 = vmatmul.f32.gmra.mxu0 %v1031
    %v1050 = vpop.f32.mrf.mxu0
    %v1051 = vadd.f32 %v1028, %v1050
    %1052 = vdwg.mxu0
    %v1053 = vmax.f32 %v1051, 0.0
    %v1054 = vld [vmem:[%s4 + $0x48] sm:$0xff]
    %v1055 = vld [vmem:[%s4 + $0x50] sm:$0xff]
    %v1056 = vld [vmem:[%s4 + $0x58] sm:$0x1]
    %v1057 = vperm.slane %v1056, 0
    %v1059 = vsel %vm1029, %v1053, 0
    %1061 = vmatpush.msra.mxu0 0.0
    %1062 = vmatpush.msra.mxu0 0.0
    %1063 = vmatpush.msra.mxu0 0.0
    %1064 = vmatpush.msra.mxu0 0.0
    %1065 = vmatpush.msra.mxu0 0.0
    %1066 = vmatpush.msra.mxu0 0.0
    %1067 = vmatpush.msra.mxu0 0.0
    %1068 = vmatpush.msra.mxu0 0.0
    %1069 = vmatpush.msra.mxu0 0.0
    %1070 = vmatpush.msra.mxu0 0.0
    %1071 = vmatpush.msra.mxu0 0.0
    %1072 = vmatpush.msra.mxu0 0.0
    %1073 = vmatpush.msra.mxu0 0.0
    %1074 = vmatpush.msra.mxu0 0.0
    %1075 = vmatpush.msra.mxu0 %v1055
    %1076 = vmatpush.msra.mxu0 %v1054
    %1077 = vmatmul.f32.gmra.mxu0 %v1059
    %v1078 = vpop.f32.mrf.mxu0
    %v1079 = vadd.f32 %v1057, %v1078
    %1080 = vdwg.mxu0
    %v1081 = vxor.u32 %v1079, 2147483648
    %v1082 = vmul.f32 %v1081, 1.442695
    %v1083 = vpow.pop %v1082
    %v1084 = vadd.f32 %v1083, 1.0
    %v1085 = vrcp.pop %v1084
    %v1086 = vmul.f32 %v1084, %v1085
    %v1087 = vsub.f32 1.0, %v1086
    %v1088 = vmul.f32 %v1085, %v1087
    %v1089 = vadd.f32 %v1085, %v1088
    %vm1090 = vweird.f32 %v1084
    %vm1091 = vweird.f32 %v1085
    %vm1092 = vmor %vm1090, %vm1091
    %v1093 = vsel %vm1092, %v1085, %v1089
    %v1094 = vand.u32 2147483647, %v1084
    %vm1095 = vcmp.eq.f32.partialorder %v1094, 8.507059e+37
    %v1096 = vand.u32 %v1084, 2147483648
    %v1097 = vor.u32 1.1754944e-38, %v1096
    %v1098 = vsel %vm1095, %v1097, %v1093
    %v1099 = vmul.f32 1.0, %v1098
    %1100 = vrot.lane.b32.xlu0 %v965, 64
    %v1101 = vpop.permute.xlu0 %1100
    %1104 = vrot.lane.b32.xlu0 %v906, 32
    %v1105 = vpop.permute.xlu0 %1104
    %1108 = vrot.lane.b32.xlu0 %v959, 64
    %v1109 = vpop.permute.xlu0 %1108
    %v1111 = vsel %vm184, %v915, %v1101
    %v1112 = vsel %vm239, %v1111, %v1105
    %vm1113 = vcmask 785408
    %v1114 = vsel %vm1113, %v1112, %v1109
    %1115 = vst [vmem:[#allocation5] sm:$0xff] %v1114
    %1116 = vst.msk [vmem:[#allocation5 + $0x8] sm:$0xff] %vm1029, %v1099
    // Predicated region
    $region26: #{tpu_custom_call.1} parent=1 // pred_check
      _
    $region27: #{tpu_custom_call.1} parent=1 // pred_check_branch
      %1118 = sbr.rel (0) target = $region29
    $region28: #{tpu_custom_call.1} parent=1 // pred_region
      %1120 = vsyncadd [#allocation4], 0
      %s1122 = sshll.u32 [#allocation5], 4
      %s1123 = int_to_ptr.vmem [resolvable:$true] %s1122
      %s1124 = sshll.u32 %s5, 4
      %s1125 = int_to_ptr.hbm [resolvable:$true] %s1124
      %1127 = dma.vmem_to_hbm [thread:$0]  %s1123, 256, %s1125, [#allocation4]
    $region29: #{tpu_custom_call.1} parent=1 // pred_fallthru
      _
    // Predicated region
    $region30: #{tpu_custom_call.1} parent=1 // pred_check
      _
    $region31: #{tpu_custom_call.1} parent=1 // pred_check_branch
      %1129 = sbr.rel (0) target = $region33
    $region32: #{tpu_custom_call.1} parent=1 // pred_region
      %1131 = dma.done [#allocation4], 256
    $region33: #{tpu_custom_call.1} parent=1 // pred_fallthru
      _
    %1132 = vsyncpa [#allocation3], 1
    %1133 = vsyncpa [#allocation4], 1

</llo_original>
